<compile_context>
chip_gen: v7x
topology: tpu7x:2x2x1
jax: 0.10.0
libtpu: 0.0.40
codegen_flags: <defaults>
</compile_context>

<pallas_src>
import jax
import jax.numpy as jnp
from jax.experimental import pallas as pl
from jax.experimental.pallas import tpu as pltpu

NEG_SLOPE = 0.01  # nn.LeakyReLU default
LANE = 128        # TPU vreg lane width


def _leaky_relu(x):
    # mul + max (2 VALU ops), identical numerics to where(x > 0, x, 0.01*x).
    return jnp.maximum(x, NEG_SLOPE * x)


def _round_up(x, m):
    return (x + m - 1) // m * m


def wdmcnet_neck_kernel(
    xv_ref,   # (TB, 64)     feature tile, vgg16    (input dtype, cast in-kernel)
    xr_ref,   # (TB, 64)     feature tile, resnet50
    xt_ref,   # (TB, 64)     feature tile, vit
    wv_ref,   # (64, 1024)   bf16  branch weight (x @ W layout)
    wr_ref,   # (64, 1024)   bf16
    wt_ref,   # (64, 1024)   bf16
    bv_ref,   # (1, 1024)    f32   branch bias
    br_ref,   # (1, 1024)    f32
    bt_ref,   # (1, 1024)    f32
    w1_ref,   # (1024, 128)  bf16  classifier fc1 weight
    b1_ref,   # (1, 128)     f32   classifier fc1 bias
    w2_ref,   # (128, Cpad)  bf16  classifier fc2 weight (cols padded to 128)
    b2_ref,   # (1, Cpad)    f32   classifier fc2 bias   (cols padded to 128)
    out_ref,  # (TB, Cpad)   bf16  padded logits
):
    bf16 = jnp.bfloat16

    def branch(x_ref, w_ref, b_ref):
        # (TB, 64) @ (64, 1024) on the MXU, f32 accumulation, bias + LeakyReLU.
        return _leaky_relu(
            jnp.dot(x_ref[...].astype(bf16), w_ref[...],
                    preferred_element_type=jnp.float32)
            + b_ref[...]
        )

    # Incremental knowledge fusion: never materialize a (3, TB, 1024) f32 slab;
    # the VPU bias+LeakyReLU of one branch hides under the next branch's MXU.
    neck = branch(xv_ref, wv_ref, bv_ref)
    neck += branch(xr_ref, wr_ref, br_ref)
    neck += branch(xt_ref, wt_ref, bt_ref)

    # Classifier: Dropout (identity at inference) -> Linear(1024, 128)
    # -> LeakyReLU -> Linear(128, C).
    # TODO(synk): training-mode dropout (p=0.5) not implemented.
    hidden = _leaky_relu(
        jnp.dot(neck.astype(bf16), w1_ref[...],
                preferred_element_type=jnp.float32)
        + b1_ref[...]
    )
    logits = (
        jnp.dot(hidden.astype(bf16), w2_ref[...],
                preferred_element_type=jnp.float32)
        + b2_ref[...]
    )
    out_ref[...] = logits.astype(out_ref.dtype)


def prepare_params(params):
    """One-time parameter preprocessing (bf16 casts + fc2 lane padding).

    Call once and reuse the result across forward calls so the casts/padding
    do not become per-call HBM passes on a microsecond-scale kernel.
    """
    bf16 = jnp.bfloat16
    M, C = params["w2"].shape
    C_pad = _round_up(max(C, LANE), LANE)   # lane-dense output columns

    w2 = (jnp.zeros((M, C_pad), jnp.float32)
          .at[:, :C].set(params["w2"].astype(jnp.float32))
          .astype(bf16))
    b2 = (jnp.zeros((1, C_pad), jnp.float32)
          .at[:, :C].set(params["b2"].astype(jnp.float32).reshape(1, -1)))

    return {
        "_prepared": True,
        "num_classes": C,
        "wv": params["wv"].astype(bf16),
        "wr": params["wr"].astype(bf16),
        "wt": params["wt"].astype(bf16),
        "bv": params["bv"].astype(jnp.float32).reshape(1, -1),
        "br": params["br"].astype(jnp.float32).reshape(1, -1),
        "bt": params["bt"].astype(jnp.float32).reshape(1, -1),
        "w1": params["w1"].astype(bf16),
        "b1": params["b1"].astype(jnp.float32).reshape(1, -1),
        "w2": w2,
        "b2": b2,
    }


def _choose_batch_tile(B, batch_tile):
    cap = _round_up(max(batch_tile, 8), 8)
    if B <= 8:
        return _round_up(max(B, 1), 8)
    # Aim for >= 2 grid steps (so v7x's two TensorCores both get work) while
    # staying under the requested tile cap.
    return max(8, min(cap, _round_up(pl.cdiv(B, 2), 8)))


def wdmcnet_neck(x_vgg16, x_resnet50, x_vit, params, *, batch_tile=512):
    """Fused neck forward pass in one Pallas kernel (batch-tiled)."""
    if not params.get("_prepared", False):
        params = prepare_params(params)

    B, Fin = x_vgg16.shape
    H = params["wv"].shape[1]        # 1024
    M = params["w1"].shape[1]        # 128
    C = params["num_classes"]
    C_pad = params["w2"].shape[1]

    # --- batch grid: weights VMEM-resident, batch tiles pipelined ------------
    TB = _choose_batch_tile(B, batch_tile)
    B_pad = _round_up(B, TB)
    if B_pad != B:
        pad = ((0, B_pad - B), (0, 0))
        x_vgg16 = jnp.pad(x_vgg16, pad)
        x_resnet50 = jnp.pad(x_resnet50, pad)
        x_vit = jnp.pad(x_vit, pad)
    grid = (B_pad // TB,)

    feat_bytes = jnp.dtype(x_vgg16.dtype).itemsize
    flops = 2 * B_pad * (3 * Fin * H + H * M + M * C_pad)
    bytes_accessed = (
        3 * B_pad * Fin * feat_bytes                  # features
        + 3 * (Fin * H * 2 + H * 4)                   # branch W (bf16) + b (f32)
        + H * M * 2 + M * 4                           # fc1
        + M * C_pad * 2 + C_pad * 4                   # fc2 (padded)
        + B_pad * C_pad * 2                           # bf16 logits writeback
    )
    cost = pl.CostEstimate(flops=flops, transcendentals=0,
                           bytes_accessed=bytes_accessed)

    # Weights / biases never change block index across the grid: fetch once,
    # single-buffered (no redundant second buffer).
    def const_spec(shape):
        return pl.BlockSpec(shape, lambda i: (0,) * len(shape),
                            pipeline_mode=pl.Buffered(1))

    feat_spec = pl.BlockSpec((TB, Fin), lambda i: (i, 0))

    out = pl.pallas_call(
        wdmcnet_neck_kernel,
        out_shape=jax.ShapeDtypeStruct((B_pad, C_pad), jnp.bfloat16),
        grid_spec=pltpu.PrefetchScalarGridSpec(
            num_scalar_prefetch=0,
            grid=grid,
            in_specs=[
                feat_spec, feat_spec, feat_spec,                 # features
                const_spec((Fin, H)), const_spec((Fin, H)), const_spec((Fin, H)),
                const_spec((1, H)), const_spec((1, H)), const_spec((1, H)),
                const_spec((H, M)), const_spec((1, M)),
                const_spec((M, C_pad)), const_spec((1, C_pad)),
            ],
            out_specs=pl.BlockSpec((TB, C_pad), lambda i: (i, 0)),
        ),
        compiler_params=pltpu.CompilerParams(
            dimension_semantics=("parallel",),    # shard batch tiles on v7x TCs
            vmem_limit_bytes=32 * 1024 * 1024,    # explicit, safe on v5e/v6e/v7x
        ),
        cost_estimate=cost,
    )(
        x_vgg16, x_resnet50, x_vit,
        params["wv"], params["wr"], params["wt"],
        params["bv"], params["br"], params["bt"],
        params["w1"], params["b1"], params["w2"], params["b2"],
    )

    # Consumers that can take the padded (B_pad, C_pad) bf16 slab directly
    # should do so; this slice is kept only for interface fidelity.
    return out[:B, :C]


def init_params(key, num_classes=8, dtype=jnp.float32):
    """Parameter init matching the module's shapes.

    PyTorch Linear(in, out) stores weight as (out, in); we store the
    transpose (in, out) so the kernel can do x @ W directly.
    """
    keys = jax.random.split(key, 10)

    def lin(kw, kb, fan_in, fan_out):
        bound = 1.0 / jnp.sqrt(fan_in)
        w = jax.random.uniform(kw, (fan_in, fan_out), dtype, -bound, bound)
        b = jax.random.uniform(kb, (1, fan_out), dtype, -bound, bound)
        return w, b

    wv, bv = lin(keys[0], keys[1], 64, 1024)            # base2neckxvgg16
    wr, br = lin(keys[2], keys[3], 64, 1024)            # base2neckxresnet50
    wt, bt = lin(keys[4], keys[5], 64, 1024)            # base2neckxvit
    w1, b1 = lin(keys[6], keys[7], 1024, 128)           # classifier fc1
    w2, b2 = lin(keys[8], keys[9], 128, num_classes)    # classifier fc2

    return dict(wv=wv, bv=bv, wr=wr, br=br, wt=wt, bt=bt,
                w1=w1, b1=b1, w2=w2, b2=b2)


def reference_forward_f32(x_vgg16, x_resnet50, x_vit, p):
    """Pure-JAX f32 reference mirroring the PyTorch forward (eval mode)."""
    lrelu = lambda x: jnp.where(x > 0, x, NEG_SLOPE * x)
    nv = lrelu(x_vgg16 @ p["wv"] + p["bv"])
    nr = lrelu(x_resnet50 @ p["wr"] + p["br"])
    nt = lrelu(x_vit @ p["wt"] + p["bt"])
    neck = nv + nr + nt
    h = lrelu(neck @ p["w1"] + p["b1"])
    return h @ p["w2"] + p["b2"]


def reference_forward_bf16(x_vgg16, x_resnet50, x_vit, p):
    """Pure-JAX reference using the same bf16 operands / f32 accumulation."""
    bf = jnp.bfloat16
    lrelu = lambda x: jnp.maximum(x, NEG_SLOPE * x)

    def lin(x, w, b):
        return (jnp.dot(x.astype(bf), w.astype(bf),
                        preferred_element_type=jnp.float32)
                + b.astype(jnp.float32))

    nv = lrelu(lin(x_vgg16, p["wv"], p["bv"]))
    nr = lrelu(lin(x_resnet50, p["wr"], p["br"]))
    nt = lrelu(lin(x_vit, p["wt"], p["bt"]))
    neck = nv + nr + nt
    h = lrelu(lin(neck, p["w1"], p["b1"]))
    return lin(h, p["w2"], p["b2"])


if __name__ == "__main__":
    key = jax.random.PRNGKey(0)
    k_params, k_v, k_r, k_t = jax.random.split(key, 4)

    B = 2  # small batch
    raw_params = init_params(k_params, num_classes=8)
    params = prepare_params(raw_params)   # one-time preprocessing, reused

    # Synthetic base-model outputs (what x_vgg16 / x_resnet50 / x_vit would be).
    x_vgg16 = jax.random.normal(k_v, (B, 64), jnp.float32)
    x_resnet50 = jax.random.normal(k_r, (B, 64), jnp.float32)
    x_vit = jax.random.normal(k_t, (B, 64), jnp.float32)

    out = wdmcnet_neck(x_vgg16, x_resnet50, x_vit, params)
    out = jax.block_until_ready(out)
    assert out.shape == (B, 8), out.shape
    out_f32 = out.astype(jnp.float32)

    # Exact-math comparison (same bf16 operands, f32 accumulation, bf16 out).
    ref_bf16 = reference_forward_bf16(x_vgg16, x_resnet50, x_vit, raw_params)
    ref_bf16 = ref_bf16.astype(jnp.bfloat16).astype(jnp.float32)
    assert jnp.allclose(out_f32, ref_bf16, atol=2e-2, rtol=2e-2), (
        float(jnp.max(jnp.abs(out_f32 - ref_bf16)))
    )

    # Sanity vs. full-f32 reference (looser: bf16 weight + output rounding).
    ref_f32 = reference_forward_f32(x_vgg16, x_resnet50, x_vit, raw_params)
    assert jnp.allclose(out_f32, ref_f32, atol=1e-1, rtol=1e-1), (
        float(jnp.max(jnp.abs(out_f32 - ref_f32)))
    )

    print("KERNEL_OK")
</pallas_src>

<mosaic_0001>
module attributes {stable_mosaic.version = 11 : i64} {
  func.func @wdmcnet_neck_kernel(%arg0: i32, %arg1: memref<8x64xf32, #tpu.memory_space<vmem>>, %arg2: memref<8x64xf32, #tpu.memory_space<vmem>>, %arg3: memref<8x64xf32, #tpu.memory_space<vmem>>, %arg4: memref<64x1024xbf16, #tpu.memory_space<vmem>>, %arg5: memref<64x1024xbf16, #tpu.memory_space<vmem>>, %arg6: memref<64x1024xbf16, #tpu.memory_space<vmem>>, %arg7: memref<1x1024xf32, #tpu.memory_space<vmem>>, %arg8: memref<1x1024xf32, #tpu.memory_space<vmem>>, %arg9: memref<1x1024xf32, #tpu.memory_space<vmem>>, %arg10: memref<1024x128xbf16, #tpu.memory_space<vmem>>, %arg11: memref<1x128xf32, #tpu.memory_space<vmem>>, %arg12: memref<128x128xbf16, #tpu.memory_space<vmem>>, %arg13: memref<1x128xf32, #tpu.memory_space<vmem>>, %arg14: memref<8x128xbf16, #tpu.memory_space<vmem>>) attributes {dimension_semantics = [#tpu.dimension_semantics<parallel>], iteration_bounds = array<i64: 1>, scalar_prefetch = 0 : i64, scratch_operands = 0 : i64, tpu.core_type = #tpu.core_type<tc>, window_params = [{transform_indices = @transform_0, window_bounds = array<i64: 8, 64>}, {transform_indices = @transform_1, window_bounds = array<i64: 8, 64>}, {transform_indices = @transform_2, window_bounds = array<i64: 8, 64>}, {pipeline_mode = #tpu.pipeline_mode<synchronous>, transform_indices = @transform_3, window_bounds = array<i64: 64, 1024>}, {pipeline_mode = #tpu.pipeline_mode<synchronous>, transform_indices = @transform_4, window_bounds = array<i64: 64, 1024>}, {pipeline_mode = #tpu.pipeline_mode<synchronous>, transform_indices = @transform_5, window_bounds = array<i64: 64, 1024>}, {pipeline_mode = #tpu.pipeline_mode<synchronous>, transform_indices = @transform_6, window_bounds = array<i64: 1, 1024>}, {pipeline_mode = #tpu.pipeline_mode<synchronous>, transform_indices = @transform_7, window_bounds = array<i64: 1, 1024>}, {pipeline_mode = #tpu.pipeline_mode<synchronous>, transform_indices = @transform_8, window_bounds = array<i64: 1, 1024>}, {pipeline_mode = #tpu.pipeline_mode<synchronous>, transform_indices = @transform_9, window_bounds = array<i64: 1024, 128>}, {pipeline_mode = #tpu.pipeline_mode<synchronous>, transform_indices = @transform_10, window_bounds = array<i64: 1, 128>}, {pipeline_mode = #tpu.pipeline_mode<synchronous>, transform_indices = @transform_11, window_bounds = array<i64: 128, 128>}, {pipeline_mode = #tpu.pipeline_mode<synchronous>, transform_indices = @transform_12, window_bounds = array<i64: 1, 128>}, {transform_indices = @transform_13, window_bounds = array<i64: 8, 128>}]} {
    %c0 = arith.constant 0 : index
    %c0_0 = arith.constant 0 : index
    %0 = vector.load %arg1[%c0, %c0_0] : memref<8x64xf32, #tpu.memory_space<vmem>>, vector<8x64xf32>
    %1 = arith.truncf %0 : vector<8x64xf32> to vector<8x64xbf16>
    %c0_1 = arith.constant 0 : index
    %c0_2 = arith.constant 0 : index
    %2 = vector.load %arg4[%c0_1, %c0_2] : memref<64x1024xbf16, #tpu.memory_space<vmem>>, vector<64x1024xbf16>
    %cst = arith.constant dense<0.000000e+00> : vector<8x1024xf32>
    %3 = tpu.matmul %1, %2, %cst {dimension_numbers = #tpu.dot_dimension_numbers<[1], [0], [0], [1], [0, 0, 1, 1], [], []>} : vector<8x64xbf16>, vector<64x1024xbf16>, vector<8x1024xf32> -> vector<8x1024xf32>
    %c0_3 = arith.constant 0 : index
    %c0_4 = arith.constant 0 : index
    %4 = vector.load %arg7[%c0_3, %c0_4] : memref<1x1024xf32, #tpu.memory_space<vmem>>, vector<1x1024xf32>
    %5 = vector.broadcast %4 : vector<1x1024xf32> to vector<8x1024xf32>
    %6 = arith.addf %3, %5 : vector<8x1024xf32>
    %cst_5 = arith.constant 0.00999999977 : f32
    %7 = vector.broadcast %cst_5 : f32 to vector<8x1024xf32>
    %8 = arith.mulf %7, %6 : vector<8x1024xf32>
    %9 = arith.maximumf %6, %8 : vector<8x1024xf32>
    %c0_6 = arith.constant 0 : index
    %c0_7 = arith.constant 0 : index
    %10 = vector.load %arg2[%c0_6, %c0_7] : memref<8x64xf32, #tpu.memory_space<vmem>>, vector<8x64xf32>
    %11 = arith.truncf %10 : vector<8x64xf32> to vector<8x64xbf16>
    %c0_8 = arith.constant 0 : index
    %c0_9 = arith.constant 0 : index
    %12 = vector.load %arg5[%c0_8, %c0_9] : memref<64x1024xbf16, #tpu.memory_space<vmem>>, vector<64x1024xbf16>
    %cst_10 = arith.constant dense<0.000000e+00> : vector<8x1024xf32>
    %13 = tpu.matmul %11, %12, %cst_10 {dimension_numbers = #tpu.dot_dimension_numbers<[1], [0], [0], [1], [0, 0, 1, 1], [], []>} : vector<8x64xbf16>, vector<64x1024xbf16>, vector<8x1024xf32> -> vector<8x1024xf32>
    %c0_11 = arith.constant 0 : index
    %c0_12 = arith.constant 0 : index
    %14 = vector.load %arg8[%c0_11, %c0_12] : memref<1x1024xf32, #tpu.memory_space<vmem>>, vector<1x1024xf32>
    %15 = vector.broadcast %14 : vector<1x1024xf32> to vector<8x1024xf32>
    %16 = arith.addf %13, %15 : vector<8x1024xf32>
    %cst_13 = arith.constant 0.00999999977 : f32
    %17 = vector.broadcast %cst_13 : f32 to vector<8x1024xf32>
    %18 = arith.mulf %17, %16 : vector<8x1024xf32>
    %19 = arith.maximumf %16, %18 : vector<8x1024xf32>
    %20 = arith.addf %9, %19 : vector<8x1024xf32>
    %c0_14 = arith.constant 0 : index
    %c0_15 = arith.constant 0 : index
    %21 = vector.load %arg3[%c0_14, %c0_15] : memref<8x64xf32, #tpu.memory_space<vmem>>, vector<8x64xf32>
    %22 = arith.truncf %21 : vector<8x64xf32> to vector<8x64xbf16>
    %c0_16 = arith.constant 0 : index
    %c0_17 = arith.constant 0 : index
    %23 = vector.load %arg6[%c0_16, %c0_17] : memref<64x1024xbf16, #tpu.memory_space<vmem>>, vector<64x1024xbf16>
    %cst_18 = arith.constant dense<0.000000e+00> : vector<8x1024xf32>
    %24 = tpu.matmul %22, %23, %cst_18 {dimension_numbers = #tpu.dot_dimension_numbers<[1], [0], [0], [1], [0, 0, 1, 1], [], []>} : vector<8x64xbf16>, vector<64x1024xbf16>, vector<8x1024xf32> -> vector<8x1024xf32>
    %c0_19 = arith.constant 0 : index
    %c0_20 = arith.constant 0 : index
    %25 = vector.load %arg9[%c0_19, %c0_20] : memref<1x1024xf32, #tpu.memory_space<vmem>>, vector<1x1024xf32>
    %26 = vector.broadcast %25 : vector<1x1024xf32> to vector<8x1024xf32>
    %27 = arith.addf %24, %26 : vector<8x1024xf32>
    %cst_21 = arith.constant 0.00999999977 : f32
    %28 = vector.broadcast %cst_21 : f32 to vector<8x1024xf32>
    %29 = arith.mulf %28, %27 : vector<8x1024xf32>
    %30 = arith.maximumf %27, %29 : vector<8x1024xf32>
    %31 = arith.addf %20, %30 : vector<8x1024xf32>
    %32 = arith.truncf %31 : vector<8x1024xf32> to vector<8x1024xbf16>
    %c0_22 = arith.constant 0 : index
    %c0_23 = arith.constant 0 : index
    %33 = vector.load %arg10[%c0_22, %c0_23] : memref<1024x128xbf16, #tpu.memory_space<vmem>>, vector<1024x128xbf16>
    %cst_24 = arith.constant dense<0.000000e+00> : vector<8x128xf32>
    %34 = tpu.matmul %32, %33, %cst_24 {dimension_numbers = #tpu.dot_dimension_numbers<[1], [0], [0], [1], [0, 0, 1, 1], [], []>} : vector<8x1024xbf16>, vector<1024x128xbf16>, vector<8x128xf32> -> vector<8x128xf32>
    %c0_25 = arith.constant 0 : index
    %c0_26 = arith.constant 0 : index
    %35 = vector.load %arg11[%c0_25, %c0_26] : memref<1x128xf32, #tpu.memory_space<vmem>>, vector<1x128xf32>
    %36 = vector.broadcast %35 : vector<1x128xf32> to vector<8x128xf32>
    %37 = arith.addf %34, %36 : vector<8x128xf32>
    %cst_27 = arith.constant 0.00999999977 : f32
    %38 = vector.broadcast %cst_27 : f32 to vector<8x128xf32>
    %39 = arith.mulf %38, %37 : vector<8x128xf32>
    %40 = arith.maximumf %37, %39 : vector<8x128xf32>
    %41 = arith.truncf %40 : vector<8x128xf32> to vector<8x128xbf16>
    %c0_28 = arith.constant 0 : index
    %c0_29 = arith.constant 0 : index
    %42 = vector.load %arg12[%c0_28, %c0_29] : memref<128x128xbf16, #tpu.memory_space<vmem>>, vector<128x128xbf16>
    %cst_30 = arith.constant dense<0.000000e+00> : vector<8x128xf32>
    %43 = tpu.matmul %41, %42, %cst_30 {dimension_numbers = #tpu.dot_dimension_numbers<[1], [0], [0], [1], [0, 0, 1, 1], [], []>} : vector<8x128xbf16>, vector<128x128xbf16>, vector<8x128xf32> -> vector<8x128xf32>
    %c0_31 = arith.constant 0 : index
    %c0_32 = arith.constant 0 : index
    %44 = vector.load %arg13[%c0_31, %c0_32] : memref<1x128xf32, #tpu.memory_space<vmem>>, vector<1x128xf32>
    %45 = vector.broadcast %44 : vector<1x128xf32> to vector<8x128xf32>
    %46 = arith.addf %43, %45 : vector<8x128xf32>
    %47 = arith.truncf %46 : vector<8x128xf32> to vector<8x128xbf16>
    %c0_33 = arith.constant 0 : index
    %c0_34 = arith.constant 0 : index
    %48 = vector.load %arg14[%c0_33, %c0_34] : memref<8x128xbf16, #tpu.memory_space<vmem>>, vector<8x128xbf16>
    tpu.vector_store %arg14[%c0_33, %c0_34], %47 {strides = array<i32>} : memref<8x128xbf16, #tpu.memory_space<vmem>>, vector<8x128xbf16>,
    return
  }
  func.func @transform_0(%arg0: i32) -> (i32, i32) {
    %c0_i32 = arith.constant 0 : i32
    %c0_i32_0 = arith.constant 0 : i32
    return %arg0, %c0_i32 : i32, i32
  }
  func.func @transform_1(%arg0: i32) -> (i32, i32) {
    %c0_i32 = arith.constant 0 : i32
    %c0_i32_0 = arith.constant 0 : i32
    return %arg0, %c0_i32 : i32, i32
  }
  func.func @transform_2(%arg0: i32) -> (i32, i32) {
    %c0_i32 = arith.constant 0 : i32
    %c0_i32_0 = arith.constant 0 : i32
    return %arg0, %c0_i32 : i32, i32
  }
  func.func @transform_3(%arg0: i32) -> (i32, i32) {
    %c0_i32 = arith.constant 0 : i32
    %c0_i32_0 = arith.constant 0 : i32
    %c0_i32_1 = arith.constant 0 : i32
    return %c0_i32, %c0_i32_0 : i32, i32
  }
  func.func @transform_4(%arg0: i32) -> (i32, i32) {
    %c0_i32 = arith.constant 0 : i32
    %c0_i32_0 = arith.constant 0 : i32
    %c0_i32_1 = arith.constant 0 : i32
    return %c0_i32, %c0_i32_0 : i32, i32
  }
  func.func @transform_5(%arg0: i32) -> (i32, i32) {
    %c0_i32 = arith.constant 0 : i32
    %c0_i32_0 = arith.constant 0 : i32
    %c0_i32_1 = arith.constant 0 : i32
    return %c0_i32, %c0_i32_0 : i32, i32
  }
  func.func @transform_6(%arg0: i32) -> (i32, i32) {
    %c0_i32 = arith.constant 0 : i32
    %c0_i32_0 = arith.constant 0 : i32
    %c0_i32_1 = arith.constant 0 : i32
    return %c0_i32, %c0_i32_0 : i32, i32
  }
  func.func @transform_7(%arg0: i32) -> (i32, i32) {
    %c0_i32 = arith.constant 0 : i32
    %c0_i32_0 = arith.constant 0 : i32
    %c0_i32_1 = arith.constant 0 : i32
    return %c0_i32, %c0_i32_0 : i32, i32
  }
  func.func @transform_8(%arg0: i32) -> (i32, i32) {
    %c0_i32 = arith.constant 0 : i32
    %c0_i32_0 = arith.constant 0 : i32
    %c0_i32_1 = arith.constant 0 : i32
    return %c0_i32, %c0_i32_0 : i32, i32
  }
  func.func @transform_9(%arg0: i32) -> (i32, i32) {
    %c0_i32 = arith.constant 0 : i32
    %c0_i32_0 = arith.constant 0 : i32
    %c0_i32_1 = arith.constant 0 : i32
    return %c0_i32, %c0_i32_0 : i32, i32
  }
  func.func @transform_10(%arg0: i32) -> (i32, i32) {
    %c0_i32 = arith.constant 0 : i32
    %c0_i32_0 = arith.constant 0 : i32
    %c0_i32_1 = arith.constant 0 : i32
    return %c0_i32, %c0_i32_0 : i32, i32
  }
  func.func @transform_11(%arg0: i32) -> (i32, i32) {
    %c0_i32 = arith.constant 0 : i32
    %c0_i32_0 = arith.constant 0 : i32
    %c0_i32_1 = arith.constant 0 : i32
    return %c0_i32, %c0_i32_0 : i32, i32
  }
  func.func @transform_12(%arg0: i32) -> (i32, i32) {
    %c0_i32 = arith.constant 0 : i32
    %c0_i32_0 = arith.constant 0 : i32
    %c0_i32_1 = arith.constant 0 : i32
    return %c0_i32, %c0_i32_0 : i32, i32
  }
  func.func @transform_13(%arg0: i32) -> (i32, i32) {
    %c0_i32 = arith.constant 0 : i32
    %c0_i32_0 = arith.constant 0 : i32
    return %arg0, %c0_i32 : i32, i32
  }
}

</mosaic_0001>

<llo_original>
// kernel: tpu_custom_call.1
$region0: #{tpu_custom_call.1}
  #allocation0 [shape = 'u32[]', space=smem, size = 0x4, offset = 0x4, fixed_abs, tag = 'smem constant byte address 0x4 - core index']
  #allocation1 [shape = 'u32[144,128]{1,0:T(1,128)}', space=vmem, size = 0x12000, scoped, tag = 'internal scratch']
  %s0 = inlined_call_operand.hbm [shape: f32[8,64], index: 0, kind: input, shape index: {}]
  %s1 = inlined_call_operand.hbm [shape: f32[8,64], index: 1, kind: input, shape index: {}]
  %s2 = inlined_call_operand.hbm [shape: f32[8,64], index: 2, kind: input, shape index: {}]
  %s3 = inlined_call_operand.hbm [shape: bf16[64,1024], index: 3, kind: input, shape index: {}]
  %s4 = inlined_call_operand.hbm [shape: bf16[64,1024], index: 4, kind: input, shape index: {}]
  %s5 = inlined_call_operand.hbm [shape: bf16[64,1024], index: 5, kind: input, shape index: {}]
  %s6 = inlined_call_operand.vmem [shape: f32[1,1024], index: 6, kind: input, shape index: {}]
  %s7 = inlined_call_operand.vmem [shape: f32[1,1024], index: 7, kind: input, shape index: {}]
  %s8 = inlined_call_operand.vmem [shape: f32[1,1024], index: 8, kind: input, shape index: {}]
  %s9 = inlined_call_operand.hbm [shape: bf16[1024,128], index: 9, kind: input, shape index: {}]
  %s10 = inlined_call_operand.vmem [shape: f32[1,128], index: 10, kind: input, shape index: {}]
  %s11 = inlined_call_operand.hbm [shape: bf16[128,128], index: 11, kind: input, shape index: {}]
  %s12 = inlined_call_operand.vmem [shape: f32[1,128], index: 12, kind: input, shape index: {}]
  %s13 = inlined_call_operand.hbm [shape: bf16[8,128], index: 13, kind: output, shape index: {}]
  %s14 = sld [smem:[#allocation0]]
  $region94: #{tpu_custom_call.1} parent=0
    _
  %s16 = ssub.s32 1, %s14
  %s17 = scalar_select 0, %s16, %s14
  $region1: #{tpu_custom_call.1} parent=0
    #allocation2 [shape = 'u8[4096]{0}', space=vmem, size = 0x1000, scoped, tag = 'input window, operand 0, single buffered']
    #allocation3 [shape = 's32[1]{0}', space=sflag, size = 0x4, scoped, tag = 'scoped memory for tpu_custom_call.1']
    #allocation4 [shape = 's32[1]{0}', space=sflag, size = 0x4, scoped, tag = 'scoped memory for tpu_custom_call.1']
    #allocation5 [shape = 'u8[4096]{0}', space=vmem, size = 0x1000, scoped, tag = 'input window, operand 1, single buffered']
    #allocation6 [shape = 's32[1]{0}', space=sflag, size = 0x4, scoped, tag = 'scoped memory for tpu_custom_call.1']
    #allocation7 [shape = 'u8[4096]{0}', space=vmem, size = 0x1000, scoped, tag = 'input window, operand 2, single buffered']
    #allocation8 [shape = 'u8[131072]{0}', space=vmem, size = 0x20000, scoped, tag = 'input window, operand 3, single buffered']
    #allocation9 [shape = 's32[1]{0}', space=sflag, size = 0x4, scoped, tag = 'scoped memory for tpu_custom_call.1']
    #allocation10 [shape = 'u8[131072]{0}', space=vmem, size = 0x20000, scoped, tag = 'input window, operand 4, single buffered']
    #allocation11 [shape = 'u8[131072]{0}', space=vmem, size = 0x20000, scoped, tag = 'input window, operand 5, single buffered']
    #allocation12 [shape = 's32[1]{0}', space=sflag, size = 0x4, scoped, tag = 'scoped memory for tpu_custom_call.1']
    #allocation13 [shape = 'u8[262144]{0}', space=vmem, size = 0x40000, scoped, tag = 'input window, operand 9, single buffered']
    #allocation14 [shape = 'u8[32768]{0}', space=vmem, size = 0x8000, scoped, tag = 'input window, operand 11, single buffered']
    #allocation15 [shape = 's32[1]{0}', space=sflag, size = 0x4, scoped, tag = 'scoped memory for tpu_custom_call.1']
    #allocation16 [shape = 'u8[2048]{0}', space=vmem, size = 0x800, scoped, tag = 'output window, operand 0, single buffered']
    %18 = vsyncpa [#allocation3], 0
    %19 = vsyncpa [#allocation6], 0
    %20 = vsyncpa [#allocation9], 0
    %21 = vsyncpa [#allocation12], 0
    %22 = vsyncpa [#allocation15], 0
    %23 = vsyncpa [#allocation4], 0
    // Predicated region
    $region2: #{tpu_custom_call.1} parent=1 // pred_check
      _
    $region3: #{tpu_custom_call.1} parent=1 // pred_check_branch
      %25 = sbr.rel (0) target = $region5
    $region4: #{tpu_custom_call.1} parent=1 // pred_region
      %s27 = ssub.s32 128, 128
      %28 = vsyncadd [#allocation3], %s27
      %s30 = sshll.u32 [#allocation2], 4
      %s31 = int_to_ptr.vmem [resolvable:$true] %s30
      %33 = dma.hbm_to_vmem [thread:$0]  %s0, 128, %s31, [#allocation3]
    $region5: #{tpu_custom_call.1} parent=1 // pred_fallthru
      _
    // Predicated region
    $region6: #{tpu_custom_call.1} parent=1 // pred_check
      _
    $region7: #{tpu_custom_call.1} parent=1 // pred_check_branch
      %35 = sbr.rel (0) target = $region9
    $region8: #{tpu_custom_call.1} parent=1 // pred_region
      %s37 = ssub.s32 128, 128
      %38 = vsyncadd [#allocation6], %s37
      %s40 = sshll.u32 [#allocation5], 4
      %s41 = int_to_ptr.vmem [resolvable:$true] %s40
      %43 = dma.hbm_to_vmem [thread:$0]  %s1, 128, %s41, [#allocation6]
    $region9: #{tpu_custom_call.1} parent=1 // pred_fallthru
      _
    // Predicated region
    $region10: #{tpu_custom_call.1} parent=1 // pred_check
      _
    $region11: #{tpu_custom_call.1} parent=1 // pred_check_branch
      %45 = sbr.rel (0) target = $region13
    $region12: #{tpu_custom_call.1} parent=1 // pred_region
      %s47 = ssub.s32 128, 128
      %48 = vsyncadd [#allocation6], %s47
      %s50 = sshll.u32 [#allocation7], 4
      %s51 = int_to_ptr.vmem [resolvable:$true] %s50
      %53 = dma.hbm_to_vmem [thread:$0]  %s2, 128, %s51, [#allocation6]
    $region13: #{tpu_custom_call.1} parent=1 // pred_fallthru
      _
    // Predicated region
    $region14: #{tpu_custom_call.1} parent=1 // pred_check
      _
    $region15: #{tpu_custom_call.1} parent=1 // pred_check_branch
      %55 = sbr.rel (0) target = $region17
    $region16: #{tpu_custom_call.1} parent=1 // pred_region
      %s57 = ssub.s32 4096, 4096
      %58 = vsyncadd [#allocation9], %s57
      %s59 = sshll.u32 [#allocation8], 4
      %s60 = int_to_ptr.vmem [resolvable:$true] %s59
      %65 = dma.hbm_to_vmem [thread:$0]  %s3, 4096, %s60, [#allocation9], 512, 512, 32
    $region17: #{tpu_custom_call.1} parent=1 // pred_fallthru
      _
    // Predicated region
    $region18: #{tpu_custom_call.1} parent=1 // pred_check
      _
    $region19: #{tpu_custom_call.1} parent=1 // pred_check_branch
      %67 = sbr.rel (0) target = $region21
    $region20: #{tpu_custom_call.1} parent=1 // pred_region
      %s69 = ssub.s32 4096, 4096
      %70 = vsyncadd [#allocation9], %s69
      %s71 = sshll.u32 [#allocation10], 4
      %s72 = int_to_ptr.vmem [resolvable:$true] %s71
      %77 = dma.hbm_to_vmem [thread:$0]  %s4, 4096, %s72, [#allocation9], 512, 512, 32
    $region21: #{tpu_custom_call.1} parent=1 // pred_fallthru
      _
    // Predicated region
    $region22: #{tpu_custom_call.1} parent=1 // pred_check
      _
    $region23: #{tpu_custom_call.1} parent=1 // pred_check_branch
      %79 = sbr.rel (0) target = $region25
    $region24: #{tpu_custom_call.1} parent=1 // pred_region
      %s81 = ssub.s32 4096, 4096
      %82 = vsyncadd [#allocation12], %s81
      %s83 = sshll.u32 [#allocation11], 4
      %s84 = int_to_ptr.vmem [resolvable:$true] %s83
      %89 = dma.hbm_to_vmem [thread:$0]  %s5, 4096, %s84, [#allocation12], 512, 512, 32
    $region25: #{tpu_custom_call.1} parent=1 // pred_fallthru
      _
    // Predicated region
    $region26: #{tpu_custom_call.1} parent=1 // pred_check
      _
    $region27: #{tpu_custom_call.1} parent=1 // pred_check_branch
      %91 = sbr.rel (0) target = $region29
    $region28: #{tpu_custom_call.1} parent=1 // pred_region
      _
    $region29: #{tpu_custom_call.1} parent=1 // pred_fallthru
      _
    // Predicated region
    $region30: #{tpu_custom_call.1} parent=1 // pred_check
      _
    $region31: #{tpu_custom_call.1} parent=1 // pred_check_branch
      %93 = sbr.rel (0) target = $region33
    $region32: #{tpu_custom_call.1} parent=1 // pred_region
      _
    $region33: #{tpu_custom_call.1} parent=1 // pred_fallthru
      _
    // Predicated region
    $region34: #{tpu_custom_call.1} parent=1 // pred_check
      _
    $region35: #{tpu_custom_call.1} parent=1 // pred_check_branch
      %95 = sbr.rel (0) target = $region37
    $region36: #{tpu_custom_call.1} parent=1 // pred_region
      _
    $region37: #{tpu_custom_call.1} parent=1 // pred_fallthru
      _
    // Predicated region
    $region38: #{tpu_custom_call.1} parent=1 // pred_check
      _
    $region39: #{tpu_custom_call.1} parent=1 // pred_check_branch
      %97 = sbr.rel (0) target = $region41
    $region40: #{tpu_custom_call.1} parent=1 // pred_region
      %s99 = ssub.s32 8192, 8192
      %100 = vsyncadd [#allocation12], %s99
      %s101 = sshll.u32 [#allocation13], 4
      %s102 = int_to_ptr.vmem [resolvable:$true] %s101
      %107 = dma.hbm_to_vmem [thread:$0]  %s9, 8192, %s102, [#allocation12], 64, 64, 4
    $region41: #{tpu_custom_call.1} parent=1 // pred_fallthru
      _
    // Predicated region
    $region42: #{tpu_custom_call.1} parent=1 // pred_check
      _
    $region43: #{tpu_custom_call.1} parent=1 // pred_check_branch
      %109 = sbr.rel (0) target = $region45
    $region44: #{tpu_custom_call.1} parent=1 // pred_region
      _
    $region45: #{tpu_custom_call.1} parent=1 // pred_fallthru
      _
    // Predicated region
    $region46: #{tpu_custom_call.1} parent=1 // pred_check
      _
    $region47: #{tpu_custom_call.1} parent=1 // pred_check_branch
      %111 = sbr.rel (0) target = $region49
    $region48: #{tpu_custom_call.1} parent=1 // pred_region
      %s113 = ssub.s32 1024, 1024
      %114 = vsyncadd [#allocation15], %s113
      %s115 = sshll.u32 [#allocation14], 4
      %s116 = int_to_ptr.vmem [resolvable:$true] %s115
      %121 = dma.hbm_to_vmem [thread:$0]  %s11, 1024, %s116, [#allocation15], 64, 64, 4
    $region49: #{tpu_custom_call.1} parent=1 // pred_fallthru
      _
    // Predicated region
    $region50: #{tpu_custom_call.1} parent=1 // pred_check
      _
    $region51: #{tpu_custom_call.1} parent=1 // pred_check_branch
      %123 = sbr.rel (0) target = $region53
    $region52: #{tpu_custom_call.1} parent=1 // pred_region
      _
    $region53: #{tpu_custom_call.1} parent=1 // pred_fallthru
      _
    // Predicated region
    $region54: #{tpu_custom_call.1} parent=1 // pred_check
      _
    $region55: #{tpu_custom_call.1} parent=1 // pred_check_branch
      %125 = sbr.rel (0) target = $region57
    $region56: #{tpu_custom_call.1} parent=1 // pred_region
      %126 = dma.done [#allocation3], 128
    $region57: #{tpu_custom_call.1} parent=1 // pred_fallthru
      _
    // Predicated region
    $region58: #{tpu_custom_call.1} parent=1 // pred_check
      _
    $region59: #{tpu_custom_call.1} parent=1 // pred_check_branch
      %128 = sbr.rel (0) target = $region61
    $region60: #{tpu_custom_call.1} parent=1 // pred_region
      %129 = dma.done [#allocation6], 128
    $region61: #{tpu_custom_call.1} parent=1 // pred_fallthru
      _
    // Predicated region
    $region62: #{tpu_custom_call.1} parent=1 // pred_check
      _
    $region63: #{tpu_custom_call.1} parent=1 // pred_check_branch
      %131 = sbr.rel (0) target = $region65
    $region64: #{tpu_custom_call.1} parent=1 // pred_region
      %132 = dma.done [#allocation6], 128
    $region65: #{tpu_custom_call.1} parent=1 // pred_fallthru
      _
    // Predicated region
    $region66: #{tpu_custom_call.1} parent=1 // pred_check
      _
    $region67: #{tpu_custom_call.1} parent=1 // pred_check_branch
      %134 = sbr.rel (0) target = $region69
    $region68: #{tpu_custom_call.1} parent=1 // pred_region
      %135 = dma.done [#allocation9], 4096
    $region69: #{tpu_custom_call.1} parent=1 // pred_fallthru
      _
    // Predicated region
    $region70: #{tpu_custom_call.1} parent=1 // pred_check
      _
    $region71: #{tpu_custom_call.1} parent=1 // pred_check_branch
      %137 = sbr.rel (0) target = $region73
    $region72: #{tpu_custom_call.1} parent=1 // pred_region
      %138 = dma.done [#allocation9], 4096
    $region73: #{tpu_custom_call.1} parent=1 // pred_fallthru
      _
    // Predicated region
    $region74: #{tpu_custom_call.1} parent=1 // pred_check
      _
    $region75: #{tpu_custom_call.1} parent=1 // pred_check_branch
      %140 = sbr.rel (0) target = $region77
    $region76: #{tpu_custom_call.1} parent=1 // pred_region
      %141 = dma.done [#allocation12], 4096
    $region77: #{tpu_custom_call.1} parent=1 // pred_fallthru
      _
    // Predicated region
    $region78: #{tpu_custom_call.1} parent=1 // pred_check
      _
    $region79: #{tpu_custom_call.1} parent=1 // pred_check_branch
      %143 = sbr.rel (0) target = $region81
    $region80: #{tpu_custom_call.1} parent=1 // pred_region
      %144 = dma.done [#allocation12], 8192
    $region81: #{tpu_custom_call.1} parent=1 // pred_fallthru
      _
    // Predicated region
    $region82: #{tpu_custom_call.1} parent=1 // pred_check
      _
    $region83: #{tpu_custom_call.1} parent=1 // pred_check_branch
      %146 = sbr.rel (0) target = $region85
    $region84: #{tpu_custom_call.1} parent=1 // pred_region
      %147 = dma.done [#allocation15], 1024
    $region85: #{tpu_custom_call.1} parent=1 // pred_fallthru
      _
    %v149 = vld [vmem:[#allocation2] sm:$0xff]
    %v150 = vpack.c.bf16 %v149, %v149
    %v151 = vld [vmem:[#allocation8] sm:$0xff]
    %v152 = vld [vmem:[#allocation8 + $0x8] sm:$0xff]
    %v153 = vld [vmem:[#allocation8 + $0x10] sm:$0xff]
    %v154 = vld [vmem:[#allocation8 + $0x18] sm:$0xff]
    %v155 = vld [vmem:[#allocation8 + $0x20] sm:$0xff]
    %v156 = vld [vmem:[#allocation8 + $0x28] sm:$0xff]
    %v157 = vld [vmem:[#allocation8 + $0x30] sm:$0xff]
    %v158 = vld [vmem:[#allocation8 + $0x38] sm:$0xff]
    %v159 = vld [vmem:[#allocation8 + $0x40] sm:$0xff]
    %v160 = vld [vmem:[#allocation8 + $0x48] sm:$0xff]
    %v161 = vld [vmem:[#allocation8 + $0x50] sm:$0xff]
    %v162 = vld [vmem:[#allocation8 + $0x58] sm:$0xff]
    %v163 = vld [vmem:[#allocation8 + $0x60] sm:$0xff]
    %v164 = vld [vmem:[#allocation8 + $0x68] sm:$0xff]
    %v165 = vld [vmem:[#allocation8 + $0x70] sm:$0xff]
    %v166 = vld [vmem:[#allocation8 + $0x78] sm:$0xff]
    %v167 = vld [vmem:[#allocation8 + $0x80] sm:$0xff]
    %v168 = vld [vmem:[#allocation8 + $0x88] sm:$0xff]
    %v169 = vld [vmem:[#allocation8 + $0x90] sm:$0xff]
    %v170 = vld [vmem:[#allocation8 + $0x98] sm:$0xff]
    %v171 = vld [vmem:[#allocation8 + $0xa0] sm:$0xff]
    %v172 = vld [vmem:[#allocation8 + $0xa8] sm:$0xff]
    %v173 = vld [vmem:[#allocation8 + $0xb0] sm:$0xff]
    %v174 = vld [vmem:[#allocation8 + $0xb8] sm:$0xff]
    %v175 = vld [vmem:[#allocation8 + $0xc0] sm:$0xff]
    %v176 = vld [vmem:[#allocation8 + $0xc8] sm:$0xff]
    %v177 = vld [vmem:[#allocation8 + $0xd0] sm:$0xff]
    %v178 = vld [vmem:[#allocation8 + $0xd8] sm:$0xff]
    %v179 = vld [vmem:[#allocation8 + $0xe0] sm:$0xff]
    %v180 = vld [vmem:[#allocation8 + $0xe8] sm:$0xff]
    %v181 = vld [vmem:[#allocation8 + $0xf0] sm:$0xff]
    %v182 = vld [vmem:[#allocation8 + $0xf8] sm:$0xff]
    %v183 = vld [vmem:[%s6] sm:$0xff]
    %v185 = vlaneseq
    %v186 = vshrl.u32 %v185, 7
    %v187 = vsub.s32 0, %v186
    %v188 = vrot.slane %v183, %v187
    %v189 = vlaneseq
    %v190 = vshrl.u32 %v189, 7
    %v191 = vsub.s32 1, %v190
    %v192 = vrot.slane %v183, %v191
    %v193 = vlaneseq
    %v194 = vshrl.u32 %v193, 7
    %v195 = vsub.s32 2, %v194
    %v196 = vrot.slane %v183, %v195
    %v197 = vlaneseq
    %v198 = vshrl.u32 %v197, 7
    %v199 = vsub.s32 3, %v198
    %v200 = vrot.slane %v183, %v199
    %v201 = vlaneseq
    %v202 = vshrl.u32 %v201, 7
    %v203 = vsub.s32 4, %v202
    %v204 = vrot.slane %v183, %v203
    %v205 = vlaneseq
    %v206 = vshrl.u32 %v205, 7
    %v207 = vsub.s32 5, %v206
    %v208 = vrot.slane %v183, %v207
    %v209 = vlaneseq
    %v210 = vshrl.u32 %v209, 7
    %v211 = vsub.s32 6, %v210
    %v212 = vrot.slane %v183, %v211
    %v213 = vlaneseq
    %v214 = vshrl.u32 %v213, 7
    %v215 = vsub.s32 7, %v214
    %v216 = vrot.slane %v183, %v215
    %v257 = vunpack.c.l.b16 %v151
    %v258 = vunpack.c.h.b16 %v151
    %v259 = vunpack.c.l.b16 %v152
    %v260 = vunpack.c.h.b16 %v152
    %v261 = vunpack.c.l.b16 %v153
    %v262 = vunpack.c.h.b16 %v153
    %v263 = vunpack.c.l.b16 %v154
    %v264 = vunpack.c.h.b16 %v154
    %v265 = vunpack.c.l.b16 %v155
    %v266 = vunpack.c.h.b16 %v155
    %v267 = vunpack.c.l.b16 %v156
    %v268 = vunpack.c.h.b16 %v156
    %v269 = vunpack.c.l.b16 %v157
    %v270 = vunpack.c.h.b16 %v157
    %v271 = vunpack.c.l.b16 %v158
    %v272 = vunpack.c.h.b16 %v158
    %v273 = vunpack.c.l.b16 %v159
    %v274 = vunpack.c.h.b16 %v159
    %v275 = vunpack.c.l.b16 %v160
    %v276 = vunpack.c.h.b16 %v160
    %v277 = vunpack.c.l.b16 %v161
    %v278 = vunpack.c.h.b16 %v161
    %v279 = vunpack.c.l.b16 %v162
    %v280 = vunpack.c.h.b16 %v162
    %v281 = vunpack.c.l.b16 %v163
    %v282 = vunpack.c.h.b16 %v163
    %v283 = vunpack.c.l.b16 %v164
    %v284 = vunpack.c.h.b16 %v164
    %v285 = vunpack.c.l.b16 %v165
    %v286 = vunpack.c.h.b16 %v165
    %v287 = vunpack.c.l.b16 %v166
    %v288 = vunpack.c.h.b16 %v166
    %v289 = vunpack.c.l.b16 %v167
    %v290 = vunpack.c.h.b16 %v167
    %v291 = vunpack.c.l.b16 %v168
    %v292 = vunpack.c.h.b16 %v168
    %v293 = vunpack.c.l.b16 %v169
    %v294 = vunpack.c.h.b16 %v169
    %v295 = vunpack.c.l.b16 %v170
    %v296 = vunpack.c.h.b16 %v170
    %v297 = vunpack.c.l.b16 %v171
    %v298 = vunpack.c.h.b16 %v171
    %v299 = vunpack.c.l.b16 %v172
    %v300 = vunpack.c.h.b16 %v172
    %v301 = vunpack.c.l.b16 %v173
    %v302 = vunpack.c.h.b16 %v173
    %v303 = vunpack.c.l.b16 %v174
    %v304 = vunpack.c.h.b16 %v174
    %v305 = vunpack.c.l.b16 %v175
    %v306 = vunpack.c.h.b16 %v175
    %v307 = vunpack.c.l.b16 %v176
    %v308 = vunpack.c.h.b16 %v176
    %v309 = vunpack.c.l.b16 %v177
    %v310 = vunpack.c.h.b16 %v177
    %v311 = vunpack.c.l.b16 %v178
    %v312 = vunpack.c.h.b16 %v178
    %v313 = vunpack.c.l.b16 %v179
    %v314 = vunpack.c.h.b16 %v179
    %v315 = vunpack.c.l.b16 %v180
    %v316 = vunpack.c.h.b16 %v180
    %v317 = vunpack.c.l.b16 %v181
    %v318 = vunpack.c.h.b16 %v181
    %v319 = vunpack.c.l.b16 %v182
    %v320 = vunpack.c.h.b16 %v182
    %v321 = vpack.c.b16 %v265, %v257
    %v322 = vpack.c.b16 %v266, %v258
    %v323 = vpack.c.b16 %v267, %v259
    %v324 = vpack.c.b16 %v268, %v260
    %v325 = vpack.c.b16 %v269, %v261
    %v326 = vpack.c.b16 %v270, %v262
    %v327 = vpack.c.b16 %v271, %v263
    %v328 = vpack.c.b16 %v272, %v264
    %v329 = vpack.c.b16 %v281, %v273
    %v330 = vpack.c.b16 %v282, %v274
    %v331 = vpack.c.b16 %v283, %v275
    %v332 = vpack.c.b16 %v284, %v276
    %v333 = vpack.c.b16 %v285, %v277
    %v334 = vpack.c.b16 %v286, %v278
    %v335 = vpack.c.b16 %v287, %v279
    %v336 = vpack.c.b16 %v288, %v280
    %v337 = vpack.c.b16 %v297, %v289
    %v338 = vpack.c.b16 %v298, %v290
    %v339 = vpack.c.b16 %v299, %v291
    %v340 = vpack.c.b16 %v300, %v292
    %v341 = vpack.c.b16 %v301, %v293
    %v342 = vpack.c.b16 %v302, %v294
    %v343 = vpack.c.b16 %v303, %v295
    %v344 = vpack.c.b16 %v304, %v296
    %v345 = vpack.c.b16 %v313, %v305
    %v346 = vpack.c.b16 %v314, %v306
    %v347 = vpack.c.b16 %v315, %v307
    %v348 = vpack.c.b16 %v316, %v308
    %v349 = vpack.c.b16 %v317, %v309
    %v350 = vpack.c.b16 %v318, %v310
    %v351 = vpack.c.b16 %v319, %v311
    %v352 = vpack.c.b16 %v320, %v312
    %vm385 = vcmask 523264
    %v387 = vsel %vm385, %v150, 0
    %389 = vmatprep.subr.bf16.mxu0 %v322
    %390 = vmatpush1.bf16.msra.mxu0 %v321
    %391 = vmatprep.subr.bf16.mxu0 %v330
    %392 = vmatpush1.bf16.msra.mxu0 %v329
    %393 = vmatprep.subr.bf16.mxu0 %v338
    %394 = vmatpush1.bf16.msra.mxu0 %v337
    %395 = vmatprep.subr.bf16.mxu0 %v346
    %396 = vmatpush1.bf16.msra.mxu0 %v345
    %397 = vmatprep.subr.bf16.mxu0 0
    %398 = vmatpush1.bf16.msra.mxu0 0
    %399 = vmatprep.subr.bf16.mxu0 0
    %400 = vmatpush1.bf16.msra.mxu0 0
    %401 = vmatprep.subr.bf16.mxu0 0
    %402 = vmatpush1.bf16.msra.mxu0 0
    %403 = vmatprep.subr.bf16.mxu0 0
    %404 = vmatpush1.bf16.msra.mxu0 0
    %405 = vmatprep.subr.bf16.mxu0 0
    %406 = vmatpush1.bf16.msra.mxu0 0
    %407 = vmatprep.subr.bf16.mxu0 0
    %408 = vmatpush1.bf16.msra.mxu0 0
    %409 = vmatprep.subr.bf16.mxu0 0
    %410 = vmatpush1.bf16.msra.mxu0 0
    %411 = vmatprep.subr.bf16.mxu0 0
    %412 = vmatpush1.bf16.msra.mxu0 0
    %413 = vmatprep.subr.bf16.mxu0 0
    %414 = vmatpush1.bf16.msra.mxu0 0
    %415 = vmatprep.subr.bf16.mxu0 0
    %416 = vmatpush1.bf16.msra.mxu0 0
    %417 = vmatprep.subr.bf16.mxu0 0
    %418 = vmatpush1.bf16.msra.mxu0 0
    %419 = vmatprep.subr.bf16.mxu0 0
    %420 = vmatpush1.bf16.msra.mxu0 0
    %421 = vmatprep.mubr.bf16.mxu0 0
    %422 = vmatmul.mubr.bf16.gmra.mrb[0].mxu0 %v387
    %v423 = vpop.f32.mrb[0].mxu0
    %v424 = vadd.f32 %v188, %v423
    %v425 = vpop.f32.mrb[0].mxu0
    %v426 = vadd.f32 %v192, %v425
    %v427 = vpop.f32.mrb[0].mxu0
    %v428 = vpop.f32.mrb[0].mxu0
    %429 = vdwg.mxu0
    %430 = vmatprep.subr.bf16.mxu0 %v324
    %431 = vmatpush1.bf16.msra.mxu0 %v323
    %432 = vmatprep.subr.bf16.mxu0 %v332
    %433 = vmatpush1.bf16.msra.mxu0 %v331
    %434 = vmatprep.subr.bf16.mxu0 %v340
    %435 = vmatpush1.bf16.msra.mxu0 %v339
    %436 = vmatprep.subr.bf16.mxu0 %v348
    %437 = vmatpush1.bf16.msra.mxu0 %v347
    %438 = vmatprep.subr.bf16.mxu0 0
    %439 = vmatpush1.bf16.msra.mxu0 0
    %440 = vmatprep.subr.bf16.mxu0 0
    %441 = vmatpush1.bf16.msra.mxu0 0
    %442 = vmatprep.subr.bf16.mxu0 0
    %443 = vmatpush1.bf16.msra.mxu0 0
    %444 = vmatprep.subr.bf16.mxu0 0
    %445 = vmatpush1.bf16.msra.mxu0 0
    %446 = vmatprep.subr.bf16.mxu0 0
    %447 = vmatpush1.bf16.msra.mxu0 0
    %448 = vmatprep.subr.bf16.mxu0 0
    %449 = vmatpush1.bf16.msra.mxu0 0
    %450 = vmatprep.subr.bf16.mxu0 0
    %451 = vmatpush1.bf16.msra.mxu0 0
    %452 = vmatprep.subr.bf16.mxu0 0
    %453 = vmatpush1.bf16.msra.mxu0 0
    %454 = vmatprep.subr.bf16.mxu0 0
    %455 = vmatpush1.bf16.msra.mxu0 0
    %456 = vmatprep.subr.bf16.mxu0 0
    %457 = vmatpush1.bf16.msra.mxu0 0
    %458 = vmatprep.subr.bf16.mxu0 0
    %459 = vmatpush1.bf16.msra.mxu0 0
    %460 = vmatprep.subr.bf16.mxu0 0
    %461 = vmatpush1.bf16.msra.mxu0 0
    %462 = vmatprep.mubr.bf16.mxu0 0
    %463 = vmatmul.mubr.bf16.gmra.mrb[0].mxu0 %v387
    %v464 = vpop.f32.mrb[0].mxu0
    %v465 = vadd.f32 %v196, %v464
    %v466 = vpop.f32.mrb[0].mxu0
    %v467 = vadd.f32 %v200, %v466
    %v468 = vpop.f32.mrb[0].mxu0
    %v469 = vpop.f32.mrb[0].mxu0
    %470 = vdwg.mxu0
    %471 = vmatprep.subr.bf16.mxu0 %v326
    %472 = vmatpush1.bf16.msra.mxu0 %v325
    %473 = vmatprep.subr.bf16.mxu0 %v334
    %474 = vmatpush1.bf16.msra.mxu0 %v333
    %475 = vmatprep.subr.bf16.mxu0 %v342
    %476 = vmatpush1.bf16.msra.mxu0 %v341
    %477 = vmatprep.subr.bf16.mxu0 %v350
    %478 = vmatpush1.bf16.msra.mxu0 %v349
    %479 = vmatprep.subr.bf16.mxu0 0
    %480 = vmatpush1.bf16.msra.mxu0 0
    %481 = vmatprep.subr.bf16.mxu0 0
    %482 = vmatpush1.bf16.msra.mxu0 0
    %483 = vmatprep.subr.bf16.mxu0 0
    %484 = vmatpush1.bf16.msra.mxu0 0
    %485 = vmatprep.subr.bf16.mxu0 0
    %486 = vmatpush1.bf16.msra.mxu0 0
    %487 = vmatprep.subr.bf16.mxu0 0
    %488 = vmatpush1.bf16.msra.mxu0 0
    %489 = vmatprep.subr.bf16.mxu0 0
    %490 = vmatpush1.bf16.msra.mxu0 0
    %491 = vmatprep.subr.bf16.mxu0 0
    %492 = vmatpush1.bf16.msra.mxu0 0
    %493 = vmatprep.subr.bf16.mxu0 0
    %494 = vmatpush1.bf16.msra.mxu0 0
    %495 = vmatprep.subr.bf16.mxu0 0
    %496 = vmatpush1.bf16.msra.mxu0 0
    %497 = vmatprep.subr.bf16.mxu0 0
    %498 = vmatpush1.bf16.msra.mxu0 0
    %499 = vmatprep.subr.bf16.mxu0 0
    %500 = vmatpush1.bf16.msra.mxu0 0
    %501 = vmatprep.subr.bf16.mxu0 0
    %502 = vmatpush1.bf16.msra.mxu0 0
    %503 = vmatprep.mubr.bf16.mxu0 0
    %504 = vmatmul.mubr.bf16.gmra.mrb[0].mxu0 %v387
    %v505 = vpop.f32.mrb[0].mxu0
    %v506 = vadd.f32 %v204, %v505
    %v507 = vpop.f32.mrb[0].mxu0
    %v508 = vadd.f32 %v208, %v507
    %v509 = vpop.f32.mrb[0].mxu0
    %v510 = vpop.f32.mrb[0].mxu0
    %511 = vdwg.mxu0
    %512 = vmatprep.subr.bf16.mxu0 %v328
    %513 = vmatpush1.bf16.msra.mxu0 %v327
    %514 = vmatprep.subr.bf16.mxu0 %v336
    %515 = vmatpush1.bf16.msra.mxu0 %v335
    %516 = vmatprep.subr.bf16.mxu0 %v344
    %517 = vmatpush1.bf16.msra.mxu0 %v343
    %518 = vmatprep.subr.bf16.mxu0 %v352
    %519 = vmatpush1.bf16.msra.mxu0 %v351
    %520 = vmatprep.subr.bf16.mxu0 0
    %521 = vmatpush1.bf16.msra.mxu0 0
    %522 = vmatprep.subr.bf16.mxu0 0
    %523 = vmatpush1.bf16.msra.mxu0 0
    %524 = vmatprep.subr.bf16.mxu0 0
    %525 = vmatpush1.bf16.msra.mxu0 0
    %526 = vmatprep.subr.bf16.mxu0 0
    %527 = vmatpush1.bf16.msra.mxu0 0
    %528 = vmatprep.subr.bf16.mxu0 0
    %529 = vmatpush1.bf16.msra.mxu0 0
    %530 = vmatprep.subr.bf16.mxu0 0
    %531 = vmatpush1.bf16.msra.mxu0 0
    %532 = vmatprep.subr.bf16.mxu0 0
    %533 = vmatpush1.bf16.msra.mxu0 0
    %534 = vmatprep.subr.bf16.mxu0 0
    %535 = vmatpush1.bf16.msra.mxu0 0
    %536 = vmatprep.subr.bf16.mxu0 0
    %537 = vmatpush1.bf16.msra.mxu0 0
    %538 = vmatprep.subr.bf16.mxu0 0
    %539 = vmatpush1.bf16.msra.mxu0 0
    %540 = vmatprep.subr.bf16.mxu0 0
    %541 = vmatpush1.bf16.msra.mxu0 0
    %542 = vmatprep.subr.bf16.mxu0 0
    %543 = vmatpush1.bf16.msra.mxu0 0
    %544 = vmatprep.mubr.bf16.mxu0 0
    %545 = vmatmul.mubr.bf16.gmra.mrb[0].mxu0 %v387
    %v546 = vpop.f32.mrb[0].mxu0
    %v547 = vadd.f32 %v212, %v546
    %v548 = vpop.f32.mrb[0].mxu0
    %v549 = vadd.f32 %v216, %v548
    %v550 = vpop.f32.mrb[0].mxu0
    %v551 = vpop.f32.mrb[0].mxu0
    %552 = vdwg.mxu0
    %v553 = vmul.f32 %v424, 0.01
    %v554 = vmul.f32 %v426, 0.01
    %v555 = vmul.f32 %v465, 0.01
    %v556 = vmul.f32 %v467, 0.01
    %v557 = vmul.f32 %v506, 0.01
    %v558 = vmul.f32 %v508, 0.01
    %v559 = vmul.f32 %v547, 0.01
    %v560 = vmul.f32 %v549, 0.01
    %v561 = vmax.f32 %v424, %v553
    %v562 = vmax.f32 %v426, %v554
    %v563 = vmax.f32 %v465, %v555
    %v564 = vmax.f32 %v467, %v556
    %v565 = vmax.f32 %v506, %v557
    %v566 = vmax.f32 %v508, %v558
    %v567 = vmax.f32 %v547, %v559
    %v568 = vmax.f32 %v549, %v560
    %v569 = vld [vmem:[#allocation5] sm:$0xff]
    %v570 = vpack.c.bf16 %v569, %v569
    %v571 = vld [vmem:[#allocation10] sm:$0xff]
    %v572 = vld [vmem:[#allocation10 + $0x8] sm:$0xff]
    %v573 = vld [vmem:[#allocation10 + $0x10] sm:$0xff]
    %v574 = vld [vmem:[#allocation10 + $0x18] sm:$0xff]
    %v575 = vld [vmem:[#allocation10 + $0x20] sm:$0xff]
    %v576 = vld [vmem:[#allocation10 + $0x28] sm:$0xff]
    %v577 = vld [vmem:[#allocation10 + $0x30] sm:$0xff]
    %v578 = vld [vmem:[#allocation10 + $0x38] sm:$0xff]
    %v579 = vld [vmem:[#allocation10 + $0x40] sm:$0xff]
    %v580 = vld [vmem:[#allocation10 + $0x48] sm:$0xff]
    %v581 = vld [vmem:[#allocation10 + $0x50] sm:$0xff]
    %v582 = vld [vmem:[#allocation10 + $0x58] sm:$0xff]
    %v583 = vld [vmem:[#allocation10 + $0x60] sm:$0xff]
    %v584 = vld [vmem:[#allocation10 + $0x68] sm:$0xff]
    %v585 = vld [vmem:[#allocation10 + $0x70] sm:$0xff]
    %v586 = vld [vmem:[#allocation10 + $0x78] sm:$0xff]
    %v587 = vld [vmem:[#allocation10 + $0x80] sm:$0xff]
    %v588 = vld [vmem:[#allocation10 + $0x88] sm:$0xff]
    %v589 = vld [vmem:[#allocation10 + $0x90] sm:$0xff]
    %v590 = vld [vmem:[#allocation10 + $0x98] sm:$0xff]
    %v591 = vld [vmem:[#allocation10 + $0xa0] sm:$0xff]
    %v592 = vld [vmem:[#allocation10 + $0xa8] sm:$0xff]
    %v593 = vld [vmem:[#allocation10 + $0xb0] sm:$0xff]
    %v594 = vld [vmem:[#allocation10 + $0xb8] sm:$0xff]
    %v595 = vld [vmem:[#allocation10 + $0xc0] sm:$0xff]
    %v596 = vld [vmem:[#allocation10 + $0xc8] sm:$0xff]
    %v597 = vld [vmem:[#allocation10 + $0xd0] sm:$0xff]
    %v598 = vld [vmem:[#allocation10 + $0xd8] sm:$0xff]
    %v599 = vld [vmem:[#allocation10 + $0xe0] sm:$0xff]
    %v600 = vld [vmem:[#allocation10 + $0xe8] sm:$0xff]
    %v601 = vld [vmem:[#allocation10 + $0xf0] sm:$0xff]
    %v602 = vld [vmem:[#allocation10 + $0xf8] sm:$0xff]
    %v603 = vld [vmem:[%s7] sm:$0xff]
    %v605 = vlaneseq
    %v606 = vshrl.u32 %v605, 7
    %v607 = vsub.s32 0, %v606
    %v608 = vrot.slane %v603, %v607
    %v609 = vlaneseq
    %v610 = vshrl.u32 %v609, 7
    %v611 = vsub.s32 1, %v610
    %v612 = vrot.slane %v603, %v611
    %v613 = vlaneseq
    %v614 = vshrl.u32 %v613, 7
    %v615 = vsub.s32 2, %v614
    %v616 = vrot.slane %v603, %v615
    %v617 = vlaneseq
    %v618 = vshrl.u32 %v617, 7
    %v619 = vsub.s32 3, %v618
    %v620 = vrot.slane %v603, %v619
    %v621 = vlaneseq
    %v622 = vshrl.u32 %v621, 7
    %v623 = vsub.s32 4, %v622
    %v624 = vrot.slane %v603, %v623
    %v625 = vlaneseq
    %v626 = vshrl.u32 %v625, 7
    %v627 = vsub.s32 5, %v626
    %v628 = vrot.slane %v603, %v627
    %v629 = vlaneseq
    %v630 = vshrl.u32 %v629, 7
    %v631 = vsub.s32 6, %v630
    %v632 = vrot.slane %v603, %v631
    %v633 = vlaneseq
    %v634 = vshrl.u32 %v633, 7
    %v635 = vsub.s32 7, %v634
    %v636 = vrot.slane %v603, %v635
    %v677 = vunpack.c.l.b16 %v571
    %v678 = vunpack.c.h.b16 %v571
    %v679 = vunpack.c.l.b16 %v572
    %v680 = vunpack.c.h.b16 %v572
    %v681 = vunpack.c.l.b16 %v573
    %v682 = vunpack.c.h.b16 %v573
    %v683 = vunpack.c.l.b16 %v574
    %v684 = vunpack.c.h.b16 %v574
    %v685 = vunpack.c.l.b16 %v575
    %v686 = vunpack.c.h.b16 %v575
    %v687 = vunpack.c.l.b16 %v576
    %v688 = vunpack.c.h.b16 %v576
    %v689 = vunpack.c.l.b16 %v577
    %v690 = vunpack.c.h.b16 %v577
    %v691 = vunpack.c.l.b16 %v578
    %v692 = vunpack.c.h.b16 %v578
    %v693 = vunpack.c.l.b16 %v579
    %v694 = vunpack.c.h.b16 %v579
    %v695 = vunpack.c.l.b16 %v580
    %v696 = vunpack.c.h.b16 %v580
    %v697 = vunpack.c.l.b16 %v581
    %v698 = vunpack.c.h.b16 %v581
    %v699 = vunpack.c.l.b16 %v582
    %v700 = vunpack.c.h.b16 %v582
    %v701 = vunpack.c.l.b16 %v583
    %v702 = vunpack.c.h.b16 %v583
    %v703 = vunpack.c.l.b16 %v584
    %v704 = vunpack.c.h.b16 %v584
    %v705 = vunpack.c.l.b16 %v585
    %v706 = vunpack.c.h.b16 %v585
    %v707 = vunpack.c.l.b16 %v586
    %v708 = vunpack.c.h.b16 %v586
    %v709 = vunpack.c.l.b16 %v587
    %v710 = vunpack.c.h.b16 %v587
    %v711 = vunpack.c.l.b16 %v588
    %v712 = vunpack.c.h.b16 %v588
    %v713 = vunpack.c.l.b16 %v589
    %v714 = vunpack.c.h.b16 %v589
    %v715 = vunpack.c.l.b16 %v590
    %v716 = vunpack.c.h.b16 %v590
    %v717 = vunpack.c.l.b16 %v591
    %v718 = vunpack.c.h.b16 %v591
    %v719 = vunpack.c.l.b16 %v592
    %v720 = vunpack.c.h.b16 %v592
    %v721 = vunpack.c.l.b16 %v593
    %v722 = vunpack.c.h.b16 %v593
    %v723 = vunpack.c.l.b16 %v594
    %v724 = vunpack.c.h.b16 %v594
    %v725 = vunpack.c.l.b16 %v595
    %v726 = vunpack.c.h.b16 %v595
    %v727 = vunpack.c.l.b16 %v596
    %v728 = vunpack.c.h.b16 %v596
    %v729 = vunpack.c.l.b16 %v597
    %v730 = vunpack.c.h.b16 %v597
    %v731 = vunpack.c.l.b16 %v598
    %v732 = vunpack.c.h.b16 %v598
    %v733 = vunpack.c.l.b16 %v599
    %v734 = vunpack.c.h.b16 %v599
    %v735 = vunpack.c.l.b16 %v600
    %v736 = vunpack.c.h.b16 %v600
    %v737 = vunpack.c.l.b16 %v601
    %v738 = vunpack.c.h.b16 %v601
    %v739 = vunpack.c.l.b16 %v602
    %v740 = vunpack.c.h.b16 %v602
    %v741 = vpack.c.b16 %v685, %v677
    %v742 = vpack.c.b16 %v686, %v678
    %v743 = vpack.c.b16 %v687, %v679
    %v744 = vpack.c.b16 %v688, %v680
    %v745 = vpack.c.b16 %v689, %v681
    %v746 = vpack.c.b16 %v690, %v682
    %v747 = vpack.c.b16 %v691, %v683
    %v748 = vpack.c.b16 %v692, %v684
    %v749 = vpack.c.b16 %v701, %v693
    %v750 = vpack.c.b16 %v702, %v694
    %v751 = vpack.c.b16 %v703, %v695
    %v752 = vpack.c.b16 %v704, %v696
    %v753 = vpack.c.b16 %v705, %v697
    %v754 = vpack.c.b16 %v706, %v698
    %v755 = vpack.c.b16 %v707, %v699
    %v756 = vpack.c.b16 %v708, %v700
    %v757 = vpack.c.b16 %v717, %v709
    %v758 = vpack.c.b16 %v718, %v710
    %v759 = vpack.c.b16 %v719, %v711
    %v760 = vpack.c.b16 %v720, %v712
    %v761 = vpack.c.b16 %v721, %v713
    %v762 = vpack.c.b16 %v722, %v714
    %v763 = vpack.c.b16 %v723, %v715
    %v764 = vpack.c.b16 %v724, %v716
    %v765 = vpack.c.b16 %v733, %v725
    %v766 = vpack.c.b16 %v734, %v726
    %v767 = vpack.c.b16 %v735, %v727
    %v768 = vpack.c.b16 %v736, %v728
    %v769 = vpack.c.b16 %v737, %v729
    %v770 = vpack.c.b16 %v738, %v730
    %v771 = vpack.c.b16 %v739, %v731
    %v772 = vpack.c.b16 %v740, %v732
    %v806 = vsel %vm385, %v570, 0
    %808 = vmatprep.subr.bf16.mxu0 %v742
    %809 = vmatpush1.bf16.msra.mxu0 %v741
    %810 = vmatprep.subr.bf16.mxu0 %v750
    %811 = vmatpush1.bf16.msra.mxu0 %v749
    %812 = vmatprep.subr.bf16.mxu0 %v758
    %813 = vmatpush1.bf16.msra.mxu0 %v757
    %814 = vmatprep.subr.bf16.mxu0 %v766
    %815 = vmatpush1.bf16.msra.mxu0 %v765
    %816 = vmatprep.subr.bf16.mxu0 0
    %817 = vmatpush1.bf16.msra.mxu0 0
    %818 = vmatprep.subr.bf16.mxu0 0
    %819 = vmatpush1.bf16.msra.mxu0 0
    %820 = vmatprep.subr.bf16.mxu0 0
    %821 = vmatpush1.bf16.msra.mxu0 0
    %822 = vmatprep.subr.bf16.mxu0 0
    %823 = vmatpush1.bf16.msra.mxu0 0
    %824 = vmatprep.subr.bf16.mxu0 0
    %825 = vmatpush1.bf16.msra.mxu0 0
    %826 = vmatprep.subr.bf16.mxu0 0
    %827 = vmatpush1.bf16.msra.mxu0 0
    %828 = vmatprep.subr.bf16.mxu0 0
    %829 = vmatpush1.bf16.msra.mxu0 0
    %830 = vmatprep.subr.bf16.mxu0 0
    %831 = vmatpush1.bf16.msra.mxu0 0
    %832 = vmatprep.subr.bf16.mxu0 0
    %833 = vmatpush1.bf16.msra.mxu0 0
    %834 = vmatprep.subr.bf16.mxu0 0
    %835 = vmatpush1.bf16.msra.mxu0 0
    %836 = vmatprep.subr.bf16.mxu0 0
    %837 = vmatpush1.bf16.msra.mxu0 0
    %838 = vmatprep.subr.bf16.mxu0 0
    %839 = vmatpush1.bf16.msra.mxu0 0
    %840 = vmatprep.mubr.bf16.mxu0 0
    %841 = vmatmul.mubr.bf16.gmra.mrb[0].mxu0 %v806
    %v842 = vpop.f32.mrb[0].mxu0
    %v843 = vadd.f32 %v608, %v842
    %v844 = vpop.f32.mrb[0].mxu0
    %v845 = vadd.f32 %v612, %v844
    %v846 = vpop.f32.mrb[0].mxu0
    %v847 = vpop.f32.mrb[0].mxu0
    %848 = vdwg.mxu0
    %849 = vmatprep.subr.bf16.mxu0 %v744
    %850 = vmatpush1.bf16.msra.mxu0 %v743
    %851 = vmatprep.subr.bf16.mxu0 %v752
    %852 = vmatpush1.bf16.msra.mxu0 %v751
    %853 = vmatprep.subr.bf16.mxu0 %v760
    %854 = vmatpush1.bf16.msra.mxu0 %v759
    %855 = vmatprep.subr.bf16.mxu0 %v768
    %856 = vmatpush1.bf16.msra.mxu0 %v767
    %857 = vmatprep.subr.bf16.mxu0 0
    %858 = vmatpush1.bf16.msra.mxu0 0
    %859 = vmatprep.subr.bf16.mxu0 0
    %860 = vmatpush1.bf16.msra.mxu0 0
    %861 = vmatprep.subr.bf16.mxu0 0
    %862 = vmatpush1.bf16.msra.mxu0 0
    %863 = vmatprep.subr.bf16.mxu0 0
    %864 = vmatpush1.bf16.msra.mxu0 0
    %865 = vmatprep.subr.bf16.mxu0 0
    %866 = vmatpush1.bf16.msra.mxu0 0
    %867 = vmatprep.subr.bf16.mxu0 0
    %868 = vmatpush1.bf16.msra.mxu0 0
    %869 = vmatprep.subr.bf16.mxu0 0
    %870 = vmatpush1.bf16.msra.mxu0 0
    %871 = vmatprep.subr.bf16.mxu0 0
    %872 = vmatpush1.bf16.msra.mxu0 0
    %873 = vmatprep.subr.bf16.mxu0 0
    %874 = vmatpush1.bf16.msra.mxu0 0
    %875 = vmatprep.subr.bf16.mxu0 0
    %876 = vmatpush1.bf16.msra.mxu0 0
    %877 = vmatprep.subr.bf16.mxu0 0
    %878 = vmatpush1.bf16.msra.mxu0 0
    %879 = vmatprep.subr.bf16.mxu0 0
    %880 = vmatpush1.bf16.msra.mxu0 0
    %881 = vmatprep.mubr.bf16.mxu0 0
    %882 = vmatmul.mubr.bf16.gmra.mrb[0].mxu0 %v806
    %v883 = vpop.f32.mrb[0].mxu0
    %v884 = vadd.f32 %v616, %v883
    %v885 = vpop.f32.mrb[0].mxu0
    %v886 = vadd.f32 %v620, %v885
    %v887 = vpop.f32.mrb[0].mxu0
    %v888 = vpop.f32.mrb[0].mxu0
    %889 = vdwg.mxu0
    %890 = vmatprep.subr.bf16.mxu0 %v746
    %891 = vmatpush1.bf16.msra.mxu0 %v745
    %892 = vmatprep.subr.bf16.mxu0 %v754
    %893 = vmatpush1.bf16.msra.mxu0 %v753
    %894 = vmatprep.subr.bf16.mxu0 %v762
    %895 = vmatpush1.bf16.msra.mxu0 %v761
    %896 = vmatprep.subr.bf16.mxu0 %v770
    %897 = vmatpush1.bf16.msra.mxu0 %v769
    %898 = vmatprep.subr.bf16.mxu0 0
    %899 = vmatpush1.bf16.msra.mxu0 0
    %900 = vmatprep.subr.bf16.mxu0 0
    %901 = vmatpush1.bf16.msra.mxu0 0
    %902 = vmatprep.subr.bf16.mxu0 0
    %903 = vmatpush1.bf16.msra.mxu0 0
    %904 = vmatprep.subr.bf16.mxu0 0
    %905 = vmatpush1.bf16.msra.mxu0 0
    %906 = vmatprep.subr.bf16.mxu0 0
    %907 = vmatpush1.bf16.msra.mxu0 0
    %908 = vmatprep.subr.bf16.mxu0 0
    %909 = vmatpush1.bf16.msra.mxu0 0
    %910 = vmatprep.subr.bf16.mxu0 0
    %911 = vmatpush1.bf16.msra.mxu0 0
    %912 = vmatprep.subr.bf16.mxu0 0
    %913 = vmatpush1.bf16.msra.mxu0 0
    %914 = vmatprep.subr.bf16.mxu0 0
    %915 = vmatpush1.bf16.msra.mxu0 0
    %916 = vmatprep.subr.bf16.mxu0 0
    %917 = vmatpush1.bf16.msra.mxu0 0
    %918 = vmatprep.subr.bf16.mxu0 0
    %919 = vmatpush1.bf16.msra.mxu0 0
    %920 = vmatprep.subr.bf16.mxu0 0
    %921 = vmatpush1.bf16.msra.mxu0 0
    %922 = vmatprep.mubr.bf16.mxu0 0
    %923 = vmatmul.mubr.bf16.gmra.mrb[0].mxu0 %v806
    %v924 = vpop.f32.mrb[0].mxu0
    %v925 = vadd.f32 %v624, %v924
    %v926 = vpop.f32.mrb[0].mxu0
    %v927 = vadd.f32 %v628, %v926
    %v928 = vpop.f32.mrb[0].mxu0
    %v929 = vpop.f32.mrb[0].mxu0
    %930 = vdwg.mxu0
    %931 = vmatprep.subr.bf16.mxu0 %v748
    %932 = vmatpush1.bf16.msra.mxu0 %v747
    %933 = vmatprep.subr.bf16.mxu0 %v756
    %934 = vmatpush1.bf16.msra.mxu0 %v755
    %935 = vmatprep.subr.bf16.mxu0 %v764
    %936 = vmatpush1.bf16.msra.mxu0 %v763
    %937 = vmatprep.subr.bf16.mxu0 %v772
    %938 = vmatpush1.bf16.msra.mxu0 %v771
    %939 = vmatprep.subr.bf16.mxu0 0
    %940 = vmatpush1.bf16.msra.mxu0 0
    %941 = vmatprep.subr.bf16.mxu0 0
    %942 = vmatpush1.bf16.msra.mxu0 0
    %943 = vmatprep.subr.bf16.mxu0 0
    %944 = vmatpush1.bf16.msra.mxu0 0
    %945 = vmatprep.subr.bf16.mxu0 0
    %946 = vmatpush1.bf16.msra.mxu0 0
    %947 = vmatprep.subr.bf16.mxu0 0
    %948 = vmatpush1.bf16.msra.mxu0 0
    %949 = vmatprep.subr.bf16.mxu0 0
    %950 = vmatpush1.bf16.msra.mxu0 0
    %951 = vmatprep.subr.bf16.mxu0 0
    %952 = vmatpush1.bf16.msra.mxu0 0
    %953 = vmatprep.subr.bf16.mxu0 0
    %954 = vmatpush1.bf16.msra.mxu0 0
    %955 = vmatprep.subr.bf16.mxu0 0
    %956 = vmatpush1.bf16.msra.mxu0 0
    %957 = vmatprep.subr.bf16.mxu0 0
    %958 = vmatpush1.bf16.msra.mxu0 0
    %959 = vmatprep.subr.bf16.mxu0 0
    %960 = vmatpush1.bf16.msra.mxu0 0
    %961 = vmatprep.subr.bf16.mxu0 0
    %962 = vmatpush1.bf16.msra.mxu0 0
    %963 = vmatprep.mubr.bf16.mxu0 0
    %964 = vmatmul.mubr.bf16.gmra.mrb[0].mxu0 %v806
    %v965 = vpop.f32.mrb[0].mxu0
    %v966 = vadd.f32 %v632, %v965
    %v967 = vpop.f32.mrb[0].mxu0
    %v968 = vadd.f32 %v636, %v967
    %v969 = vpop.f32.mrb[0].mxu0
    %v970 = vpop.f32.mrb[0].mxu0
    %971 = vdwg.mxu0
    %v972 = vmul.f32 %v843, 0.01
    %v973 = vmul.f32 %v845, 0.01
    %v974 = vmul.f32 %v884, 0.01
    %v975 = vmul.f32 %v886, 0.01
    %v976 = vmul.f32 %v925, 0.01
    %v977 = vmul.f32 %v927, 0.01
    %v978 = vmul.f32 %v966, 0.01
    %v979 = vmul.f32 %v968, 0.01
    %v980 = vmax.f32 %v843, %v972
    %v981 = vmax.f32 %v845, %v973
    %v982 = vmax.f32 %v884, %v974
    %v983 = vmax.f32 %v886, %v975
    %v984 = vmax.f32 %v925, %v976
    %v985 = vmax.f32 %v927, %v977
    %v986 = vmax.f32 %v966, %v978
    %v987 = vmax.f32 %v968, %v979
    %v988 = vadd.f32 %v561, %v980
    %v989 = vadd.f32 %v562, %v981
    %v990 = vadd.f32 %v563, %v982
    %v991 = vadd.f32 %v564, %v983
    %v992 = vadd.f32 %v565, %v984
    %v993 = vadd.f32 %v566, %v985
    %v994 = vadd.f32 %v567, %v986
    %v995 = vadd.f32 %v568, %v987
    %v996 = vld [vmem:[#allocation7] sm:$0xff]
    %v997 = vpack.c.bf16 %v996, %v996
    %v998 = vld [vmem:[#allocation11] sm:$0xff]
    %v999 = vld [vmem:[#allocation11 + $0x8] sm:$0xff]
    %v1000 = vld [vmem:[#allocation11 + $0x10] sm:$0xff]
    %v1001 = vld [vmem:[#allocation11 + $0x18] sm:$0xff]
    %v1002 = vld [vmem:[#allocation11 + $0x20] sm:$0xff]
    %v1003 = vld [vmem:[#allocation11 + $0x28] sm:$0xff]
    %v1004 = vld [vmem:[#allocation11 + $0x30] sm:$0xff]
    %v1005 = vld [vmem:[#allocation11 + $0x38] sm:$0xff]
    %v1006 = vld [vmem:[#allocation11 + $0x40] sm:$0xff]
    %v1007 = vld [vmem:[#allocation11 + $0x48] sm:$0xff]
    %v1008 = vld [vmem:[#allocation11 + $0x50] sm:$0xff]
    %v1009 = vld [vmem:[#allocation11 + $0x58] sm:$0xff]
    %v1010 = vld [vmem:[#allocation11 + $0x60] sm:$0xff]
    %v1011 = vld [vmem:[#allocation11 + $0x68] sm:$0xff]
    %v1012 = vld [vmem:[#allocation11 + $0x70] sm:$0xff]
    %v1013 = vld [vmem:[#allocation11 + $0x78] sm:$0xff]
    %v1014 = vld [vmem:[#allocation11 + $0x80] sm:$0xff]
    %v1015 = vld [vmem:[#allocation11 + $0x88] sm:$0xff]
    %v1016 = vld [vmem:[#allocation11 + $0x90] sm:$0xff]
    %v1017 = vld [vmem:[#allocation11 + $0x98] sm:$0xff]
    %v1018 = vld [vmem:[#allocation11 + $0xa0] sm:$0xff]
    %v1019 = vld [vmem:[#allocation11 + $0xa8] sm:$0xff]
    %v1020 = vld [vmem:[#allocation11 + $0xb0] sm:$0xff]
    %v1021 = vld [vmem:[#allocation11 + $0xb8] sm:$0xff]
    %v1022 = vld [vmem:[#allocation11 + $0xc0] sm:$0xff]
    %v1023 = vld [vmem:[#allocation11 + $0xc8] sm:$0xff]
    %v1024 = vld [vmem:[#allocation11 + $0xd0] sm:$0xff]
    %v1025 = vld [vmem:[#allocation11 + $0xd8] sm:$0xff]
    %v1026 = vld [vmem:[#allocation11 + $0xe0] sm:$0xff]
    %v1027 = vld [vmem:[#allocation11 + $0xe8] sm:$0xff]
    %v1028 = vld [vmem:[#allocation11 + $0xf0] sm:$0xff]
    %v1029 = vld [vmem:[#allocation11 + $0xf8] sm:$0xff]
    %v1030 = vld [vmem:[%s8] sm:$0xff]
    %v1032 = vlaneseq
    %v1033 = vshrl.u32 %v1032, 7
    %v1034 = vsub.s32 0, %v1033
    %v1035 = vrot.slane %v1030, %v1034
    %v1036 = vlaneseq
    %v1037 = vshrl.u32 %v1036, 7
    %v1038 = vsub.s32 1, %v1037
    %v1039 = vrot.slane %v1030, %v1038
    %v1040 = vlaneseq
    %v1041 = vshrl.u32 %v1040, 7
    %v1042 = vsub.s32 2, %v1041
    %v1043 = vrot.slane %v1030, %v1042
    %v1044 = vlaneseq
    %v1045 = vshrl.u32 %v1044, 7
    %v1046 = vsub.s32 3, %v1045
    %v1047 = vrot.slane %v1030, %v1046
    %v1048 = vlaneseq
    %v1049 = vshrl.u32 %v1048, 7
    %v1050 = vsub.s32 4, %v1049
    %v1051 = vrot.slane %v1030, %v1050
    %v1052 = vlaneseq
    %v1053 = vshrl.u32 %v1052, 7
    %v1054 = vsub.s32 5, %v1053
    %v1055 = vrot.slane %v1030, %v1054
    %v1056 = vlaneseq
    %v1057 = vshrl.u32 %v1056, 7
    %v1058 = vsub.s32 6, %v1057
    %v1059 = vrot.slane %v1030, %v1058
    %v1060 = vlaneseq
    %v1061 = vshrl.u32 %v1060, 7
    %v1062 = vsub.s32 7, %v1061
    %v1063 = vrot.slane %v1030, %v1062
    %v1104 = vunpack.c.l.b16 %v998
    %v1105 = vunpack.c.h.b16 %v998
    %v1106 = vunpack.c.l.b16 %v999
    %v1107 = vunpack.c.h.b16 %v999
    %v1108 = vunpack.c.l.b16 %v1000
    %v1109 = vunpack.c.h.b16 %v1000
    %v1110 = vunpack.c.l.b16 %v1001
    %v1111 = vunpack.c.h.b16 %v1001
    %v1112 = vunpack.c.l.b16 %v1002
    %v1113 = vunpack.c.h.b16 %v1002
    %v1114 = vunpack.c.l.b16 %v1003
    %v1115 = vunpack.c.h.b16 %v1003
    %v1116 = vunpack.c.l.b16 %v1004
    %v1117 = vunpack.c.h.b16 %v1004
    %v1118 = vunpack.c.l.b16 %v1005
    %v1119 = vunpack.c.h.b16 %v1005
    %v1120 = vunpack.c.l.b16 %v1006
    %v1121 = vunpack.c.h.b16 %v1006
    %v1122 = vunpack.c.l.b16 %v1007
    %v1123 = vunpack.c.h.b16 %v1007
    %v1124 = vunpack.c.l.b16 %v1008
    %v1125 = vunpack.c.h.b16 %v1008
    %v1126 = vunpack.c.l.b16 %v1009
    %v1127 = vunpack.c.h.b16 %v1009
    %v1128 = vunpack.c.l.b16 %v1010
    %v1129 = vunpack.c.h.b16 %v1010
    %v1130 = vunpack.c.l.b16 %v1011
    %v1131 = vunpack.c.h.b16 %v1011
    %v1132 = vunpack.c.l.b16 %v1012
    %v1133 = vunpack.c.h.b16 %v1012
    %v1134 = vunpack.c.l.b16 %v1013
    %v1135 = vunpack.c.h.b16 %v1013
    %v1136 = vunpack.c.l.b16 %v1014
    %v1137 = vunpack.c.h.b16 %v1014
    %v1138 = vunpack.c.l.b16 %v1015
    %v1139 = vunpack.c.h.b16 %v1015
    %v1140 = vunpack.c.l.b16 %v1016
    %v1141 = vunpack.c.h.b16 %v1016
    %v1142 = vunpack.c.l.b16 %v1017
    %v1143 = vunpack.c.h.b16 %v1017
    %v1144 = vunpack.c.l.b16 %v1018
    %v1145 = vunpack.c.h.b16 %v1018
    %v1146 = vunpack.c.l.b16 %v1019
    %v1147 = vunpack.c.h.b16 %v1019
    %v1148 = vunpack.c.l.b16 %v1020
    %v1149 = vunpack.c.h.b16 %v1020
    %v1150 = vunpack.c.l.b16 %v1021
    %v1151 = vunpack.c.h.b16 %v1021
    %v1152 = vunpack.c.l.b16 %v1022
    %v1153 = vunpack.c.h.b16 %v1022
    %v1154 = vunpack.c.l.b16 %v1023
    %v1155 = vunpack.c.h.b16 %v1023
    %v1156 = vunpack.c.l.b16 %v1024
    %v1157 = vunpack.c.h.b16 %v1024
    %v1158 = vunpack.c.l.b16 %v1025
    %v1159 = vunpack.c.h.b16 %v1025
    %v1160 = vunpack.c.l.b16 %v1026
    %v1161 = vunpack.c.h.b16 %v1026
    %v1162 = vunpack.c.l.b16 %v1027
    %v1163 = vunpack.c.h.b16 %v1027
    %v1164 = vunpack.c.l.b16 %v1028
    %v1165 = vunpack.c.h.b16 %v1028
    %v1166 = vunpack.c.l.b16 %v1029
    %v1167 = vunpack.c.h.b16 %v1029
    %v1168 = vpack.c.b16 %v1112, %v1104
    %v1169 = vpack.c.b16 %v1113, %v1105
    %v1170 = vpack.c.b16 %v1114, %v1106
    %v1171 = vpack.c.b16 %v1115, %v1107
    %v1172 = vpack.c.b16 %v1116, %v1108
    %v1173 = vpack.c.b16 %v1117, %v1109
    %v1174 = vpack.c.b16 %v1118, %v1110
    %v1175 = vpack.c.b16 %v1119, %v1111
    %v1176 = vpack.c.b16 %v1128, %v1120
    %v1177 = vpack.c.b16 %v1129, %v1121
    %v1178 = vpack.c.b16 %v1130, %v1122
    %v1179 = vpack.c.b16 %v1131, %v1123
    %v1180 = vpack.c.b16 %v1132, %v1124
    %v1181 = vpack.c.b16 %v1133, %v1125
    %v1182 = vpack.c.b16 %v1134, %v1126
    %v1183 = vpack.c.b16 %v1135, %v1127
    %v1184 = vpack.c.b16 %v1144, %v1136
    %v1185 = vpack.c.b16 %v1145, %v1137
    %v1186 = vpack.c.b16 %v1146, %v1138
    %v1187 = vpack.c.b16 %v1147, %v1139
    %v1188 = vpack.c.b16 %v1148, %v1140
    %v1189 = vpack.c.b16 %v1149, %v1141
    %v1190 = vpack.c.b16 %v1150, %v1142
    %v1191 = vpack.c.b16 %v1151, %v1143
    %v1192 = vpack.c.b16 %v1160, %v1152
    %v1193 = vpack.c.b16 %v1161, %v1153
    %v1194 = vpack.c.b16 %v1162, %v1154
    %v1195 = vpack.c.b16 %v1163, %v1155
    %v1196 = vpack.c.b16 %v1164, %v1156
    %v1197 = vpack.c.b16 %v1165, %v1157
    %v1198 = vpack.c.b16 %v1166, %v1158
    %v1199 = vpack.c.b16 %v1167, %v1159
    %v1233 = vsel %vm385, %v997, 0
    %1235 = vmatprep.subr.bf16.mxu0 %v1169
    %1236 = vmatpush1.bf16.msra.mxu0 %v1168
    %1237 = vmatprep.subr.bf16.mxu0 %v1177
    %1238 = vmatpush1.bf16.msra.mxu0 %v1176
    %1239 = vmatprep.subr.bf16.mxu0 %v1185
    %1240 = vmatpush1.bf16.msra.mxu0 %v1184
    %1241 = vmatprep.subr.bf16.mxu0 %v1193
    %1242 = vmatpush1.bf16.msra.mxu0 %v1192
    %1243 = vmatprep.subr.bf16.mxu0 0
    %1244 = vmatpush1.bf16.msra.mxu0 0
    %1245 = vmatprep.subr.bf16.mxu0 0
    %1246 = vmatpush1.bf16.msra.mxu0 0
    %1247 = vmatprep.subr.bf16.mxu0 0
    %1248 = vmatpush1.bf16.msra.mxu0 0
    %1249 = vmatprep.subr.bf16.mxu0 0
    %1250 = vmatpush1.bf16.msra.mxu0 0
    %1251 = vmatprep.subr.bf16.mxu0 0
    %1252 = vmatpush1.bf16.msra.mxu0 0
    %1253 = vmatprep.subr.bf16.mxu0 0
    %1254 = vmatpush1.bf16.msra.mxu0 0
    %1255 = vmatprep.subr.bf16.mxu0 0
    %1256 = vmatpush1.bf16.msra.mxu0 0
    %1257 = vmatprep.subr.bf16.mxu0 0
    %1258 = vmatpush1.bf16.msra.mxu0 0
    %1259 = vmatprep.subr.bf16.mxu0 0
    %1260 = vmatpush1.bf16.msra.mxu0 0
    %1261 = vmatprep.subr.bf16.mxu0 0
    %1262 = vmatpush1.bf16.msra.mxu0 0
    %1263 = vmatprep.subr.bf16.mxu0 0
    %1264 = vmatpush1.bf16.msra.mxu0 0
    %1265 = vmatprep.subr.bf16.mxu0 0
    %1266 = vmatpush1.bf16.msra.mxu0 0
    %1267 = vmatprep.mubr.bf16.mxu0 0
    %1268 = vmatmul.mubr.bf16.gmra.mrb[0].mxu0 %v1233
    %v1269 = vpop.f32.mrb[0].mxu0
    %v1270 = vadd.f32 %v1035, %v1269
    %v1271 = vpop.f32.mrb[0].mxu0
    %v1272 = vadd.f32 %v1039, %v1271
    %v1273 = vpop.f32.mrb[0].mxu0
    %v1274 = vpop.f32.mrb[0].mxu0
    %1275 = vdwg.mxu0
    %1276 = vmatprep.subr.bf16.mxu0 %v1171
    %1277 = vmatpush1.bf16.msra.mxu0 %v1170
    %1278 = vmatprep.subr.bf16.mxu0 %v1179
    %1279 = vmatpush1.bf16.msra.mxu0 %v1178
    %1280 = vmatprep.subr.bf16.mxu0 %v1187
    %1281 = vmatpush1.bf16.msra.mxu0 %v1186
    %1282 = vmatprep.subr.bf16.mxu0 %v1195
    %1283 = vmatpush1.bf16.msra.mxu0 %v1194
    %1284 = vmatprep.subr.bf16.mxu0 0
    %1285 = vmatpush1.bf16.msra.mxu0 0
    %1286 = vmatprep.subr.bf16.mxu0 0
    %1287 = vmatpush1.bf16.msra.mxu0 0
    %1288 = vmatprep.subr.bf16.mxu0 0
    %1289 = vmatpush1.bf16.msra.mxu0 0
    %1290 = vmatprep.subr.bf16.mxu0 0
    %1291 = vmatpush1.bf16.msra.mxu0 0
    %1292 = vmatprep.subr.bf16.mxu0 0
    %1293 = vmatpush1.bf16.msra.mxu0 0
    %1294 = vmatprep.subr.bf16.mxu0 0
    %1295 = vmatpush1.bf16.msra.mxu0 0
    %1296 = vmatprep.subr.bf16.mxu0 0
    %1297 = vmatpush1.bf16.msra.mxu0 0
    %1298 = vmatprep.subr.bf16.mxu0 0
    %1299 = vmatpush1.bf16.msra.mxu0 0
    %1300 = vmatprep.subr.bf16.mxu0 0
    %1301 = vmatpush1.bf16.msra.mxu0 0
    %1302 = vmatprep.subr.bf16.mxu0 0
    %1303 = vmatpush1.bf16.msra.mxu0 0
    %1304 = vmatprep.subr.bf16.mxu0 0
    %1305 = vmatpush1.bf16.msra.mxu0 0
    %1306 = vmatprep.subr.bf16.mxu0 0
    %1307 = vmatpush1.bf16.msra.mxu0 0
    %1308 = vmatprep.mubr.bf16.mxu0 0
    %1309 = vmatmul.mubr.bf16.gmra.mrb[0].mxu0 %v1233
    %v1310 = vpop.f32.mrb[0].mxu0
    %v1311 = vadd.f32 %v1043, %v1310
    %v1312 = vpop.f32.mrb[0].mxu0
    %v1313 = vadd.f32 %v1047, %v1312
    %v1314 = vpop.f32.mrb[0].mxu0
    %v1315 = vpop.f32.mrb[0].mxu0
    %1316 = vdwg.mxu0
    %1317 = vmatprep.subr.bf16.mxu0 %v1173
    %1318 = vmatpush1.bf16.msra.mxu0 %v1172
    %1319 = vmatprep.subr.bf16.mxu0 %v1181
    %1320 = vmatpush1.bf16.msra.mxu0 %v1180
    %1321 = vmatprep.subr.bf16.mxu0 %v1189
    %1322 = vmatpush1.bf16.msra.mxu0 %v1188
    %1323 = vmatprep.subr.bf16.mxu0 %v1197
    %1324 = vmatpush1.bf16.msra.mxu0 %v1196
    %1325 = vmatprep.subr.bf16.mxu0 0
    %1326 = vmatpush1.bf16.msra.mxu0 0
    %1327 = vmatprep.subr.bf16.mxu0 0
    %1328 = vmatpush1.bf16.msra.mxu0 0
    %1329 = vmatprep.subr.bf16.mxu0 0
    %1330 = vmatpush1.bf16.msra.mxu0 0
    %1331 = vmatprep.subr.bf16.mxu0 0
    %1332 = vmatpush1.bf16.msra.mxu0 0
    %1333 = vmatprep.subr.bf16.mxu0 0
    %1334 = vmatpush1.bf16.msra.mxu0 0
    %1335 = vmatprep.subr.bf16.mxu0 0
    %1336 = vmatpush1.bf16.msra.mxu0 0
    %1337 = vmatprep.subr.bf16.mxu0 0
    %1338 = vmatpush1.bf16.msra.mxu0 0
    %1339 = vmatprep.subr.bf16.mxu0 0
    %1340 = vmatpush1.bf16.msra.mxu0 0
    %1341 = vmatprep.subr.bf16.mxu0 0
    %1342 = vmatpush1.bf16.msra.mxu0 0
    %1343 = vmatprep.subr.bf16.mxu0 0
    %1344 = vmatpush1.bf16.msra.mxu0 0
    %1345 = vmatprep.subr.bf16.mxu0 0
    %1346 = vmatpush1.bf16.msra.mxu0 0
    %1347 = vmatprep.subr.bf16.mxu0 0
    %1348 = vmatpush1.bf16.msra.mxu0 0
    %1349 = vmatprep.mubr.bf16.mxu0 0
    %1350 = vmatmul.mubr.bf16.gmra.mrb[0].mxu0 %v1233
    %v1351 = vpop.f32.mrb[0].mxu0
    %v1352 = vadd.f32 %v1051, %v1351
    %v1353 = vpop.f32.mrb[0].mxu0
    %v1354 = vadd.f32 %v1055, %v1353
    %v1355 = vpop.f32.mrb[0].mxu0
    %v1356 = vpop.f32.mrb[0].mxu0
    %1357 = vdwg.mxu0
    %1358 = vmatprep.subr.bf16.mxu0 %v1175
    %1359 = vmatpush1.bf16.msra.mxu0 %v1174
    %1360 = vmatprep.subr.bf16.mxu0 %v1183
    %1361 = vmatpush1.bf16.msra.mxu0 %v1182
    %1362 = vmatprep.subr.bf16.mxu0 %v1191
    %1363 = vmatpush1.bf16.msra.mxu0 %v1190
    %1364 = vmatprep.subr.bf16.mxu0 %v1199
    %1365 = vmatpush1.bf16.msra.mxu0 %v1198
    %1366 = vmatprep.subr.bf16.mxu0 0
    %1367 = vmatpush1.bf16.msra.mxu0 0
    %1368 = vmatprep.subr.bf16.mxu0 0
    %1369 = vmatpush1.bf16.msra.mxu0 0
    %1370 = vmatprep.subr.bf16.mxu0 0
    %1371 = vmatpush1.bf16.msra.mxu0 0
    %1372 = vmatprep.subr.bf16.mxu0 0
    %1373 = vmatpush1.bf16.msra.mxu0 0
    %1374 = vmatprep.subr.bf16.mxu0 0
    %1375 = vmatpush1.bf16.msra.mxu0 0
    %1376 = vmatprep.subr.bf16.mxu0 0
    %1377 = vmatpush1.bf16.msra.mxu0 0
    %1378 = vmatprep.subr.bf16.mxu0 0
    %1379 = vmatpush1.bf16.msra.mxu0 0
    %1380 = vmatprep.subr.bf16.mxu0 0
    %1381 = vmatpush1.bf16.msra.mxu0 0
    %1382 = vmatprep.subr.bf16.mxu0 0
    %1383 = vmatpush1.bf16.msra.mxu0 0
    %1384 = vmatprep.subr.bf16.mxu0 0
    %1385 = vmatpush1.bf16.msra.mxu0 0
    %1386 = vmatprep.subr.bf16.mxu0 0
    %1387 = vmatpush1.bf16.msra.mxu0 0
    %1388 = vmatprep.subr.bf16.mxu0 0
    %1389 = vmatpush1.bf16.msra.mxu0 0
    %1390 = vmatprep.mubr.bf16.mxu0 0
    %1391 = vmatmul.mubr.bf16.gmra.mrb[0].mxu0 %v1233
    %v1392 = vpop.f32.mrb[0].mxu0
    %v1393 = vadd.f32 %v1059, %v1392
    %v1394 = vpop.f32.mrb[0].mxu0
    %v1395 = vadd.f32 %v1063, %v1394
    %v1396 = vpop.f32.mrb[0].mxu0
    %v1397 = vpop.f32.mrb[0].mxu0
    %1398 = vdwg.mxu0
    %v1399 = vmul.f32 %v1270, 0.01
    %v1400 = vmul.f32 %v1272, 0.01
    %v1401 = vmul.f32 %v1311, 0.01
    %v1402 = vmul.f32 %v1313, 0.01
    %v1403 = vmul.f32 %v1352, 0.01
    %v1404 = vmul.f32 %v1354, 0.01
    %v1405 = vmul.f32 %v1393, 0.01
    %v1406 = vmul.f32 %v1395, 0.01
    %v1407 = vmax.f32 %v1270, %v1399
    %v1408 = vmax.f32 %v1272, %v1400
    %v1409 = vmax.f32 %v1311, %v1401
    %v1410 = vmax.f32 %v1313, %v1402
    %v1411 = vmax.f32 %v1352, %v1403
    %v1412 = vmax.f32 %v1354, %v1404
    %v1413 = vmax.f32 %v1393, %v1405
    %v1414 = vmax.f32 %v1395, %v1406
    %v1415 = vadd.f32 %v988, %v1407
    %v1416 = vadd.f32 %v989, %v1408
    %v1417 = vadd.f32 %v990, %v1409
    %v1418 = vadd.f32 %v991, %v1410
    %v1419 = vadd.f32 %v992, %v1411
    %v1420 = vadd.f32 %v993, %v1412
    %v1421 = vadd.f32 %v994, %v1413
    %v1422 = vadd.f32 %v995, %v1414
    %v1423 = vpack.c.bf16 %v1415, %v1415
    %v1424 = vpack.c.bf16 %v1416, %v1416
    %v1425 = vpack.c.bf16 %v1417, %v1417
    %v1426 = vpack.c.bf16 %v1418, %v1418
    %v1427 = vpack.c.bf16 %v1419, %v1419
    %v1428 = vpack.c.bf16 %v1420, %v1420
    %v1429 = vpack.c.bf16 %v1421, %v1421
    %v1430 = vpack.c.bf16 %v1422, %v1422
    %v1431 = vld [vmem:[#allocation13] sm:$0xf]
    %v1432 = vld [vmem:[#allocation13 + $0x4] sm:$0xf]
    %v1433 = vld [vmem:[#allocation13 + $0x8] sm:$0xf]
    %v1434 = vld [vmem:[#allocation13 + $0xc] sm:$0xf]
    %v1435 = vld [vmem:[#allocation13 + $0x10] sm:$0xf]
    %v1436 = vld [vmem:[#allocation13 + $0x14] sm:$0xf]
    %v1437 = vld [vmem:[#allocation13 + $0x18] sm:$0xf]
    %v1438 = vld [vmem:[#allocation13 + $0x1c] sm:$0xf]
    %v1439 = vld [vmem:[#allocation13 + $0x20] sm:$0xf]
    %v1440 = vld [vmem:[#allocation13 + $0x24] sm:$0xf]
    %v1441 = vld [vmem:[#allocation13 + $0x28] sm:$0xf]
    %v1442 = vld [vmem:[#allocation13 + $0x2c] sm:$0xf]
    %v1443 = vld [vmem:[#allocation13 + $0x30] sm:$0xf]
    %v1444 = vld [vmem:[#allocation13 + $0x34] sm:$0xf]
    %v1445 = vld [vmem:[#allocation13 + $0x38] sm:$0xf]
    %v1446 = vld [vmem:[#allocation13 + $0x3c] sm:$0xf]
    %v1447 = vld [vmem:[#allocation13 + $0x40] sm:$0xf]
    %v1448 = vld [vmem:[#allocation13 + $0x44] sm:$0xf]
    %v1449 = vld [vmem:[#allocation13 + $0x48] sm:$0xf]
    %v1450 = vld [vmem:[#allocation13 + $0x4c] sm:$0xf]
    %v1451 = vld [vmem:[#allocation13 + $0x50] sm:$0xf]
    %v1452 = vld [vmem:[#allocation13 + $0x54] sm:$0xf]
    %v1453 = vld [vmem:[#allocation13 + $0x58] sm:$0xf]
    %v1454 = vld [vmem:[#allocation13 + $0x5c] sm:$0xf]
    %v1455 = vld [vmem:[#allocation13 + $0x60] sm:$0xf]
    %v1456 = vld [vmem:[#allocation13 + $0x64] sm:$0xf]
    %v1457 = vld [vmem:[#allocation13 + $0x68] sm:$0xf]
    %v1458 = vld [vmem:[#allocation13 + $0x6c] sm:$0xf]
    %v1459 = vld [vmem:[#allocation13 + $0x70] sm:$0xf]
    %v1460 = vld [vmem:[#allocation13 + $0x74] sm:$0xf]
    %v1461 = vld [vmem:[#allocation13 + $0x78] sm:$0xf]
    %v1462 = vld [vmem:[#allocation13 + $0x7c] sm:$0xf]
    %v1463 = vld [vmem:[#allocation13 + $0x80] sm:$0xf]
    %v1464 = vld [vmem:[#allocation13 + $0x84] sm:$0xf]
    %v1465 = vld [vmem:[#allocation13 + $0x88] sm:$0xf]
    %v1466 = vld [vmem:[#allocation13 + $0x8c] sm:$0xf]
    %v1467 = vld [vmem:[#allocation13 + $0x90] sm:$0xf]
    %v1468 = vld [vmem:[#allocation13 + $0x94] sm:$0xf]
    %v1469 = vld [vmem:[#allocation13 + $0x98] sm:$0xf]
    %v1470 = vld [vmem:[#allocation13 + $0x9c] sm:$0xf]
    %v1471 = vld [vmem:[#allocation13 + $0xa0] sm:$0xf]
    %v1472 = vld [vmem:[#allocation13 + $0xa4] sm:$0xf]
    %v1473 = vld [vmem:[#allocation13 + $0xa8] sm:$0xf]
    %v1474 = vld [vmem:[#allocation13 + $0xac] sm:$0xf]
    %v1475 = vld [vmem:[#allocation13 + $0xb0] sm:$0xf]
    %v1476 = vld [vmem:[#allocation13 + $0xb4] sm:$0xf]
    %v1477 = vld [vmem:[#allocation13 + $0xb8] sm:$0xf]
    %v1478 = vld [vmem:[#allocation13 + $0xbc] sm:$0xf]
    %v1479 = vld [vmem:[#allocation13 + $0xc0] sm:$0xf]
    %v1480 = vld [vmem:[#allocation13 + $0xc4] sm:$0xf]
    %v1481 = vld [vmem:[#allocation13 + $0xc8] sm:$0xf]
    %v1482 = vld [vmem:[#allocation13 + $0xcc] sm:$0xf]
    %v1483 = vld [vmem:[#allocation13 + $0xd0] sm:$0xf]
    %v1484 = vld [vmem:[#allocation13 + $0xd4] sm:$0xf]
    %v1485 = vld [vmem:[#allocation13 + $0xd8] sm:$0xf]
    %v1486 = vld [vmem:[#allocation13 + $0xdc] sm:$0xf]
    %v1487 = vld [vmem:[#allocation13 + $0xe0] sm:$0xf]
    %v1488 = vld [vmem:[#allocation13 + $0xe4] sm:$0xf]
    %v1489 = vld [vmem:[#allocation13 + $0xe8] sm:$0xf]
    %v1490 = vld [vmem:[#allocation13 + $0xec] sm:$0xf]
    %v1491 = vld [vmem:[#allocation13 + $0xf0] sm:$0xf]
    %v1492 = vld [vmem:[#allocation13 + $0xf4] sm:$0xf]
    %v1493 = vld [vmem:[#allocation13 + $0xf8] sm:$0xf]
    %v1494 = vld [vmem:[#allocation13 + $0xfc] sm:$0xf]
    %v1495 = vld [vmem:[#allocation13 + $0x100] sm:$0xf]
    %v1496 = vld [vmem:[#allocation13 + $0x104] sm:$0xf]
    %v1497 = vld [vmem:[#allocation13 + $0x108] sm:$0xf]
    %v1498 = vld [vmem:[#allocation13 + $0x10c] sm:$0xf]
    %v1499 = vld [vmem:[#allocation13 + $0x110] sm:$0xf]
    %v1500 = vld [vmem:[#allocation13 + $0x114] sm:$0xf]
    %v1501 = vld [vmem:[#allocation13 + $0x118] sm:$0xf]
    %v1502 = vld [vmem:[#allocation13 + $0x11c] sm:$0xf]
    %v1503 = vld [vmem:[#allocation13 + $0x120] sm:$0xf]
    %v1504 = vld [vmem:[#allocation13 + $0x124] sm:$0xf]
    %v1505 = vld [vmem:[#allocation13 + $0x128] sm:$0xf]
    %v1506 = vld [vmem:[#allocation13 + $0x12c] sm:$0xf]
    %v1507 = vld [vmem:[#allocation13 + $0x130] sm:$0xf]
    %v1508 = vld [vmem:[#allocation13 + $0x134] sm:$0xf]
    %v1509 = vld [vmem:[#allocation13 + $0x138] sm:$0xf]
    %v1510 = vld [vmem:[#allocation13 + $0x13c] sm:$0xf]
    %v1511 = vld [vmem:[#allocation13 + $0x140] sm:$0xf]
    %v1512 = vld [vmem:[#allocation13 + $0x144] sm:$0xf]
    %v1513 = vld [vmem:[#allocation13 + $0x148] sm:$0xf]
    %v1514 = vld [vmem:[#allocation13 + $0x14c] sm:$0xf]
    %v1515 = vld [vmem:[#allocation13 + $0x150] sm:$0xf]
    %v1516 = vld [vmem:[#allocation13 + $0x154] sm:$0xf]
    %v1517 = vld [vmem:[#allocation13 + $0x158] sm:$0xf]
    %v1518 = vld [vmem:[#allocation13 + $0x15c] sm:$0xf]
    %v1519 = vld [vmem:[#allocation13 + $0x160] sm:$0xf]
    %v1520 = vld [vmem:[#allocation13 + $0x164] sm:$0xf]
    %v1521 = vld [vmem:[#allocation13 + $0x168] sm:$0xf]
    %v1522 = vld [vmem:[#allocation13 + $0x16c] sm:$0xf]
    %v1523 = vld [vmem:[#allocation13 + $0x170] sm:$0xf]
    %v1524 = vld [vmem:[#allocation13 + $0x174] sm:$0xf]
    %v1525 = vld [vmem:[#allocation13 + $0x178] sm:$0xf]
    %v1526 = vld [vmem:[#allocation13 + $0x17c] sm:$0xf]
    %v1527 = vld [vmem:[#allocation13 + $0x180] sm:$0xf]
    %v1528 = vld [vmem:[#allocation13 + $0x184] sm:$0xf]
    %v1529 = vld [vmem:[#allocation13 + $0x188] sm:$0xf]
    %v1530 = vld [vmem:[#allocation13 + $0x18c] sm:$0xf]
    %v1531 = vld [vmem:[#allocation13 + $0x190] sm:$0xf]
    %v1532 = vld [vmem:[#allocation13 + $0x194] sm:$0xf]
    %v1533 = vld [vmem:[#allocation13 + $0x198] sm:$0xf]
    %v1534 = vld [vmem:[#allocation13 + $0x19c] sm:$0xf]
    %v1535 = vld [vmem:[#allocation13 + $0x1a0] sm:$0xf]
    %v1536 = vld [vmem:[#allocation13 + $0x1a4] sm:$0xf]
    %v1537 = vld [vmem:[#allocation13 + $0x1a8] sm:$0xf]
    %v1538 = vld [vmem:[#allocation13 + $0x1ac] sm:$0xf]
    %v1539 = vld [vmem:[#allocation13 + $0x1b0] sm:$0xf]
    %v1540 = vld [vmem:[#allocation13 + $0x1b4] sm:$0xf]
    %v1541 = vld [vmem:[#allocation13 + $0x1b8] sm:$0xf]
    %v1542 = vld [vmem:[#allocation13 + $0x1bc] sm:$0xf]
    %v1543 = vld [vmem:[#allocation13 + $0x1c0] sm:$0xf]
    %v1544 = vld [vmem:[#allocation13 + $0x1c4] sm:$0xf]
    %v1545 = vld [vmem:[#allocation13 + $0x1c8] sm:$0xf]
    %v1546 = vld [vmem:[#allocation13 + $0x1cc] sm:$0xf]
    %v1547 = vld [vmem:[#allocation13 + $0x1d0] sm:$0xf]
    %v1548 = vld [vmem:[#allocation13 + $0x1d4] sm:$0xf]
    %v1549 = vld [vmem:[#allocation13 + $0x1d8] sm:$0xf]
    %v1550 = vld [vmem:[#allocation13 + $0x1dc] sm:$0xf]
    %v1551 = vld [vmem:[#allocation13 + $0x1e0] sm:$0xf]
    %v1552 = vld [vmem:[#allocation13 + $0x1e4] sm:$0xf]
    %v1553 = vld [vmem:[#allocation13 + $0x1e8] sm:$0xf]
    %v1554 = vld [vmem:[#allocation13 + $0x1ec] sm:$0xf]
    %v1555 = vld [vmem:[#allocation13 + $0x1f0] sm:$0xf]
    %v1556 = vld [vmem:[#allocation13 + $0x1f4] sm:$0xf]
    %v1557 = vld [vmem:[#allocation13 + $0x1f8] sm:$0xf]
    %v1558 = vld [vmem:[#allocation13 + $0x1fc] sm:$0xf]
    %v1559 = vld [vmem:[%s10] sm:$0x1]
    %v1561 = vlaneseq
    %v1562 = vshrl.u32 %v1561, 7
    %v1563 = vsub.s32 0, %v1562
    %v1564 = vrot.slane %v1559, %v1563
    %v1694 = vunpack.c.l.b16 %v1431
    %v1695 = vunpack.c.l.b16 %v1432
    %v1696 = vunpack.c.l.b16 %v1433
    %v1697 = vunpack.c.l.b16 %v1434
    %v1698 = vunpack.c.l.b16 %v1435
    %v1699 = vunpack.c.l.b16 %v1436
    %v1700 = vunpack.c.l.b16 %v1437
    %v1701 = vunpack.c.l.b16 %v1438
    %v1702 = vunpack.c.l.b16 %v1439
    %v1703 = vunpack.c.l.b16 %v1440
    %v1704 = vunpack.c.l.b16 %v1441
    %v1705 = vunpack.c.l.b16 %v1442
    %v1706 = vunpack.c.l.b16 %v1443
    %v1707 = vunpack.c.l.b16 %v1444
    %v1708 = vunpack.c.l.b16 %v1445
    %v1709 = vunpack.c.l.b16 %v1446
    %v1710 = vunpack.c.l.b16 %v1447
    %v1711 = vunpack.c.l.b16 %v1448
    %v1712 = vunpack.c.l.b16 %v1449
    %v1713 = vunpack.c.l.b16 %v1450
    %v1714 = vunpack.c.l.b16 %v1451
    %v1715 = vunpack.c.l.b16 %v1452
    %v1716 = vunpack.c.l.b16 %v1453
    %v1717 = vunpack.c.l.b16 %v1454
    %v1718 = vunpack.c.l.b16 %v1455
    %v1719 = vunpack.c.l.b16 %v1456
    %v1720 = vunpack.c.l.b16 %v1457
    %v1721 = vunpack.c.l.b16 %v1458
    %v1722 = vunpack.c.l.b16 %v1459
    %v1723 = vunpack.c.l.b16 %v1460
    %v1724 = vunpack.c.l.b16 %v1461
    %v1725 = vunpack.c.l.b16 %v1462
    %v1726 = vunpack.c.l.b16 %v1463
    %v1727 = vunpack.c.l.b16 %v1464
    %v1728 = vunpack.c.l.b16 %v1465
    %v1729 = vunpack.c.l.b16 %v1466
    %v1730 = vunpack.c.l.b16 %v1467
    %v1731 = vunpack.c.l.b16 %v1468
    %v1732 = vunpack.c.l.b16 %v1469
    %v1733 = vunpack.c.l.b16 %v1470
    %v1734 = vunpack.c.l.b16 %v1471
    %v1735 = vunpack.c.l.b16 %v1472
    %v1736 = vunpack.c.l.b16 %v1473
    %v1737 = vunpack.c.l.b16 %v1474
    %v1738 = vunpack.c.l.b16 %v1475
    %v1739 = vunpack.c.l.b16 %v1476
    %v1740 = vunpack.c.l.b16 %v1477
    %v1741 = vunpack.c.l.b16 %v1478
    %v1742 = vunpack.c.l.b16 %v1479
    %v1743 = vunpack.c.l.b16 %v1480
    %v1744 = vunpack.c.l.b16 %v1481
    %v1745 = vunpack.c.l.b16 %v1482
    %v1746 = vunpack.c.l.b16 %v1483
    %v1747 = vunpack.c.l.b16 %v1484
    %v1748 = vunpack.c.l.b16 %v1485
    %v1749 = vunpack.c.l.b16 %v1486
    %v1750 = vunpack.c.l.b16 %v1487
    %v1751 = vunpack.c.l.b16 %v1488
    %v1752 = vunpack.c.l.b16 %v1489
    %v1753 = vunpack.c.l.b16 %v1490
    %v1754 = vunpack.c.l.b16 %v1491
    %v1755 = vunpack.c.l.b16 %v1492
    %v1756 = vunpack.c.l.b16 %v1493
    %v1757 = vunpack.c.l.b16 %v1494
    %v1758 = vunpack.c.l.b16 %v1495
    %v1759 = vunpack.c.l.b16 %v1496
    %v1760 = vunpack.c.l.b16 %v1497
    %v1761 = vunpack.c.l.b16 %v1498
    %v1762 = vunpack.c.l.b16 %v1499
    %v1763 = vunpack.c.l.b16 %v1500
    %v1764 = vunpack.c.l.b16 %v1501
    %v1765 = vunpack.c.l.b16 %v1502
    %v1766 = vunpack.c.l.b16 %v1503
    %v1767 = vunpack.c.l.b16 %v1504
    %v1768 = vunpack.c.l.b16 %v1505
    %v1769 = vunpack.c.l.b16 %v1506
    %v1770 = vunpack.c.l.b16 %v1507
    %v1771 = vunpack.c.l.b16 %v1508
    %v1772 = vunpack.c.l.b16 %v1509
    %v1773 = vunpack.c.l.b16 %v1510
    %v1774 = vunpack.c.l.b16 %v1511
    %v1775 = vunpack.c.l.b16 %v1512
    %v1776 = vunpack.c.l.b16 %v1513
    %v1777 = vunpack.c.l.b16 %v1514
    %v1778 = vunpack.c.l.b16 %v1515
    %v1779 = vunpack.c.l.b16 %v1516
    %v1780 = vunpack.c.l.b16 %v1517
    %v1781 = vunpack.c.l.b16 %v1518
    %v1782 = vunpack.c.l.b16 %v1519
    %v1783 = vunpack.c.l.b16 %v1520
    %v1784 = vunpack.c.l.b16 %v1521
    %v1785 = vunpack.c.l.b16 %v1522
    %v1786 = vunpack.c.l.b16 %v1523
    %v1787 = vunpack.c.l.b16 %v1524
    %v1788 = vunpack.c.l.b16 %v1525
    %v1789 = vunpack.c.l.b16 %v1526
    %v1790 = vunpack.c.l.b16 %v1527
    %v1791 = vunpack.c.l.b16 %v1528
    %v1792 = vunpack.c.l.b16 %v1529
    %v1793 = vunpack.c.l.b16 %v1530
    %v1794 = vunpack.c.l.b16 %v1531
    %v1795 = vunpack.c.l.b16 %v1532
    %v1796 = vunpack.c.l.b16 %v1533
    %v1797 = vunpack.c.l.b16 %v1534
    %v1798 = vunpack.c.l.b16 %v1535
    %v1799 = vunpack.c.l.b16 %v1536
    %v1800 = vunpack.c.l.b16 %v1537
    %v1801 = vunpack.c.l.b16 %v1538
    %v1802 = vunpack.c.l.b16 %v1539
    %v1803 = vunpack.c.l.b16 %v1540
    %v1804 = vunpack.c.l.b16 %v1541
    %v1805 = vunpack.c.l.b16 %v1542
    %v1806 = vunpack.c.l.b16 %v1543
    %v1807 = vunpack.c.l.b16 %v1544
    %v1808 = vunpack.c.l.b16 %v1545
    %v1809 = vunpack.c.l.b16 %v1546
    %v1810 = vunpack.c.l.b16 %v1547
    %v1811 = vunpack.c.l.b16 %v1548
    %v1812 = vunpack.c.l.b16 %v1549
    %v1813 = vunpack.c.l.b16 %v1550
    %v1814 = vunpack.c.l.b16 %v1551
    %v1815 = vunpack.c.l.b16 %v1552
    %v1816 = vunpack.c.l.b16 %v1553
    %v1817 = vunpack.c.l.b16 %v1554
    %v1818 = vunpack.c.l.b16 %v1555
    %v1819 = vunpack.c.l.b16 %v1556
    %v1820 = vunpack.c.l.b16 %v1557
    %v1821 = vunpack.c.l.b16 %v1558
    %v1822 = vpack.c.b16 %v1695, %v1694
    %v1823 = vpack.c.b16 %v1697, %v1696
    %v1824 = vpack.c.b16 %v1699, %v1698
    %v1825 = vpack.c.b16 %v1701, %v1700
    %v1826 = vpack.c.b16 %v1703, %v1702
    %v1827 = vpack.c.b16 %v1705, %v1704
    %v1828 = vpack.c.b16 %v1707, %v1706
    %v1829 = vpack.c.b16 %v1709, %v1708
    %v1830 = vpack.c.b16 %v1711, %v1710
    %v1831 = vpack.c.b16 %v1713, %v1712
    %v1832 = vpack.c.b16 %v1715, %v1714
    %v1833 = vpack.c.b16 %v1717, %v1716
    %v1834 = vpack.c.b16 %v1719, %v1718
    %v1835 = vpack.c.b16 %v1721, %v1720
    %v1836 = vpack.c.b16 %v1723, %v1722
    %v1837 = vpack.c.b16 %v1725, %v1724
    %v1838 = vpack.c.b16 %v1727, %v1726
    %v1839 = vpack.c.b16 %v1729, %v1728
    %v1840 = vpack.c.b16 %v1731, %v1730
    %v1841 = vpack.c.b16 %v1733, %v1732
    %v1842 = vpack.c.b16 %v1735, %v1734
    %v1843 = vpack.c.b16 %v1737, %v1736
    %v1844 = vpack.c.b16 %v1739, %v1738
    %v1845 = vpack.c.b16 %v1741, %v1740
    %v1846 = vpack.c.b16 %v1743, %v1742
    %v1847 = vpack.c.b16 %v1745, %v1744
    %v1848 = vpack.c.b16 %v1747, %v1746
    %v1849 = vpack.c.b16 %v1749, %v1748
    %v1850 = vpack.c.b16 %v1751, %v1750
    %v1851 = vpack.c.b16 %v1753, %v1752
    %v1852 = vpack.c.b16 %v1755, %v1754
    %v1853 = vpack.c.b16 %v1757, %v1756
    %v1854 = vpack.c.b16 %v1759, %v1758
    %v1855 = vpack.c.b16 %v1761, %v1760
    %v1856 = vpack.c.b16 %v1763, %v1762
    %v1857 = vpack.c.b16 %v1765, %v1764
    %v1858 = vpack.c.b16 %v1767, %v1766
    %v1859 = vpack.c.b16 %v1769, %v1768
    %v1860 = vpack.c.b16 %v1771, %v1770
    %v1861 = vpack.c.b16 %v1773, %v1772
    %v1862 = vpack.c.b16 %v1775, %v1774
    %v1863 = vpack.c.b16 %v1777, %v1776
    %v1864 = vpack.c.b16 %v1779, %v1778
    %v1865 = vpack.c.b16 %v1781, %v1780
    %v1866 = vpack.c.b16 %v1783, %v1782
    %v1867 = vpack.c.b16 %v1785, %v1784
    %v1868 = vpack.c.b16 %v1787, %v1786
    %v1869 = vpack.c.b16 %v1789, %v1788
    %v1870 = vpack.c.b16 %v1791, %v1790
    %v1871 = vpack.c.b16 %v1793, %v1792
    %v1872 = vpack.c.b16 %v1795, %v1794
    %v1873 = vpack.c.b16 %v1797, %v1796
    %v1874 = vpack.c.b16 %v1799, %v1798
    %v1875 = vpack.c.b16 %v1801, %v1800
    %v1876 = vpack.c.b16 %v1803, %v1802
    %v1877 = vpack.c.b16 %v1805, %v1804
    %v1878 = vpack.c.b16 %v1807, %v1806
    %v1879 = vpack.c.b16 %v1809, %v1808
    %v1880 = vpack.c.b16 %v1811, %v1810
    %v1881 = vpack.c.b16 %v1813, %v1812
    %v1882 = vpack.c.b16 %v1815, %v1814
    %v1883 = vpack.c.b16 %v1817, %v1816
    %v1884 = vpack.c.b16 %v1819, %v1818
    %v1885 = vpack.c.b16 %v1821, %v1820
    %1950 = vmatprep.subr.bf16.mxu0 0
    %1951 = vmatpush1.bf16.msra.mxu0 %v1822
    %1952 = vmatprep.subr.bf16.mxu0 0
    %1953 = vmatpush1.bf16.msra.mxu0 %v1823
    %1954 = vmatprep.subr.bf16.mxu0 0
    %1955 = vmatpush1.bf16.msra.mxu0 %v1824
    %1956 = vmatprep.subr.bf16.mxu0 0
    %1957 = vmatpush1.bf16.msra.mxu0 %v1825
    %1958 = vmatprep.subr.bf16.mxu0 0
    %1959 = vmatpush1.bf16.msra.mxu0 %v1826
    %1960 = vmatprep.subr.bf16.mxu0 0
    %1961 = vmatpush1.bf16.msra.mxu0 %v1827
    %1962 = vmatprep.subr.bf16.mxu0 0
    %1963 = vmatpush1.bf16.msra.mxu0 %v1828
    %1964 = vmatprep.subr.bf16.mxu0 0
    %1965 = vmatpush1.bf16.msra.mxu0 %v1829
    %1966 = vmatprep.subr.bf16.mxu0 0
    %1967 = vmatpush1.bf16.msra.mxu0 %v1830
    %1968 = vmatprep.subr.bf16.mxu0 0
    %1969 = vmatpush1.bf16.msra.mxu0 %v1831
    %1970 = vmatprep.subr.bf16.mxu0 0
    %1971 = vmatpush1.bf16.msra.mxu0 %v1832
    %1972 = vmatprep.subr.bf16.mxu0 0
    %1973 = vmatpush1.bf16.msra.mxu0 %v1833
    %1974 = vmatprep.subr.bf16.mxu0 0
    %1975 = vmatpush1.bf16.msra.mxu0 %v1834
    %1976 = vmatprep.subr.bf16.mxu0 0
    %1977 = vmatpush1.bf16.msra.mxu0 %v1835
    %1978 = vmatprep.subr.bf16.mxu0 0
    %1979 = vmatpush1.bf16.msra.mxu0 %v1836
    %1980 = vmatprep.subr.bf16.mxu0 0
    %1981 = vmatpush1.bf16.msra.mxu0 %v1837
    %1982 = vmatprep.mubr.bf16.mxu0 %v1424
    %1983 = vmatmul.mubr.bf16.gmra.mrb[0].mxu0 %v1423
    %v1984 = vpop.f32.mrb[0].mxu0
    %v1985 = vadd.f32 %v1564, %v1984
    %v1986 = vpop.f32.mrb[0].mxu0
    %v1987 = vpop.f32.mrb[0].mxu0
    %v1988 = vpop.f32.mrb[0].mxu0
    %1989 = vdwg.mxu0
    %1990 = vmatprep.subr.bf16.mxu0 0
    %1991 = vmatpush1.bf16.msra.mxu0 %v1838
    %1992 = vmatprep.subr.bf16.mxu0 0
    %1993 = vmatpush1.bf16.msra.mxu0 %v1839
    %1994 = vmatprep.subr.bf16.mxu0 0
    %1995 = vmatpush1.bf16.msra.mxu0 %v1840
    %1996 = vmatprep.subr.bf16.mxu0 0
    %1997 = vmatpush1.bf16.msra.mxu0 %v1841
    %1998 = vmatprep.subr.bf16.mxu0 0
    %1999 = vmatpush1.bf16.msra.mxu0 %v1842
    %2000 = vmatprep.subr.bf16.mxu0 0
    %2001 = vmatpush1.bf16.msra.mxu0 %v1843
    %2002 = vmatprep.subr.bf16.mxu0 0
    %2003 = vmatpush1.bf16.msra.mxu0 %v1844
    %2004 = vmatprep.subr.bf16.mxu0 0
    %2005 = vmatpush1.bf16.msra.mxu0 %v1845
    %2006 = vmatprep.subr.bf16.mxu0 0
    %2007 = vmatpush1.bf16.msra.mxu0 %v1846
    %2008 = vmatprep.subr.bf16.mxu0 0
    %2009 = vmatpush1.bf16.msra.mxu0 %v1847
    %2010 = vmatprep.subr.bf16.mxu0 0
    %2011 = vmatpush1.bf16.msra.mxu0 %v1848
    %2012 = vmatprep.subr.bf16.mxu0 0
    %2013 = vmatpush1.bf16.msra.mxu0 %v1849
    %2014 = vmatprep.subr.bf16.mxu0 0
    %2015 = vmatpush1.bf16.msra.mxu0 %v1850
    %2016 = vmatprep.subr.bf16.mxu0 0
    %2017 = vmatpush1.bf16.msra.mxu0 %v1851
    %2018 = vmatprep.subr.bf16.mxu0 0
    %2019 = vmatpush1.bf16.msra.mxu0 %v1852
    %2020 = vmatprep.subr.bf16.mxu0 0
    %2021 = vmatpush1.bf16.msra.mxu0 %v1853
    %2022 = vmatprep.mubr.bf16.mxu0 %v1426
    %2023 = vmatmul.mubr.bf16.gmra.mrb[0].mxu0 %v1425
    %v2024 = vpop.f32.mrb[0].mxu0
    %v2025 = vadd.f32 %v1985, %v2024
    %v2026 = vpop.f32.mrb[0].mxu0
    %v2027 = vpop.f32.mrb[0].mxu0
    %v2028 = vpop.f32.mrb[0].mxu0
    %2029 = vdwg.mxu0
    %2030 = vmatprep.subr.bf16.mxu0 0
    %2031 = vmatpush1.bf16.msra.mxu0 %v1854
    %2032 = vmatprep.subr.bf16.mxu0 0
    %2033 = vmatpush1.bf16.msra.mxu0 %v1855
    %2034 = vmatprep.subr.bf16.mxu0 0
    %2035 = vmatpush1.bf16.msra.mxu0 %v1856
    %2036 = vmatprep.subr.bf16.mxu0 0
    %2037 = vmatpush1.bf16.msra.mxu0 %v1857
    %2038 = vmatprep.subr.bf16.mxu0 0
    %2039 = vmatpush1.bf16.msra.mxu0 %v1858
    %2040 = vmatprep.subr.bf16.mxu0 0
    %2041 = vmatpush1.bf16.msra.mxu0 %v1859
    %2042 = vmatprep.subr.bf16.mxu0 0
    %2043 = vmatpush1.bf16.msra.mxu0 %v1860
    %2044 = vmatprep.subr.bf16.mxu0 0
    %2045 = vmatpush1.bf16.msra.mxu0 %v1861
    %2046 = vmatprep.subr.bf16.mxu0 0
    %2047 = vmatpush1.bf16.msra.mxu0 %v1862
    %2048 = vmatprep.subr.bf16.mxu0 0
    %2049 = vmatpush1.bf16.msra.mxu0 %v1863
    %2050 = vmatprep.subr.bf16.mxu0 0
    %2051 = vmatpush1.bf16.msra.mxu0 %v1864
    %2052 = vmatprep.subr.bf16.mxu0 0
    %2053 = vmatpush1.bf16.msra.mxu0 %v1865
    %2054 = vmatprep.subr.bf16.mxu0 0
    %2055 = vmatpush1.bf16.msra.mxu0 %v1866
    %2056 = vmatprep.subr.bf16.mxu0 0
    %2057 = vmatpush1.bf16.msra.mxu0 %v1867
    %2058 = vmatprep.subr.bf16.mxu0 0
    %2059 = vmatpush1.bf16.msra.mxu0 %v1868
    %2060 = vmatprep.subr.bf16.mxu0 0
    %2061 = vmatpush1.bf16.msra.mxu0 %v1869
    %2062 = vmatprep.mubr.bf16.mxu0 %v1428
    %2063 = vmatmul.mubr.bf16.gmra.mrb[0].mxu0 %v1427
    %v2064 = vpop.f32.mrb[0].mxu0
    %v2065 = vadd.f32 %v2025, %v2064
    %v2066 = vpop.f32.mrb[0].mxu0
    %v2067 = vpop.f32.mrb[0].mxu0
    %v2068 = vpop.f32.mrb[0].mxu0
    %2069 = vdwg.mxu0
    %2070 = vmatprep.subr.bf16.mxu0 0
    %2071 = vmatpush1.bf16.msra.mxu0 %v1870
    %2072 = vmatprep.subr.bf16.mxu0 0
    %2073 = vmatpush1.bf16.msra.mxu0 %v1871
    %2074 = vmatprep.subr.bf16.mxu0 0
    %2075 = vmatpush1.bf16.msra.mxu0 %v1872
    %2076 = vmatprep.subr.bf16.mxu0 0
    %2077 = vmatpush1.bf16.msra.mxu0 %v1873
    %2078 = vmatprep.subr.bf16.mxu0 0
    %2079 = vmatpush1.bf16.msra.mxu0 %v1874
    %2080 = vmatprep.subr.bf16.mxu0 0
    %2081 = vmatpush1.bf16.msra.mxu0 %v1875
    %2082 = vmatprep.subr.bf16.mxu0 0
    %2083 = vmatpush1.bf16.msra.mxu0 %v1876
    %2084 = vmatprep.subr.bf16.mxu0 0
    %2085 = vmatpush1.bf16.msra.mxu0 %v1877
    %2086 = vmatprep.subr.bf16.mxu0 0
    %2087 = vmatpush1.bf16.msra.mxu0 %v1878
    %2088 = vmatprep.subr.bf16.mxu0 0
    %2089 = vmatpush1.bf16.msra.mxu0 %v1879
    %2090 = vmatprep.subr.bf16.mxu0 0
    %2091 = vmatpush1.bf16.msra.mxu0 %v1880
    %2092 = vmatprep.subr.bf16.mxu0 0
    %2093 = vmatpush1.bf16.msra.mxu0 %v1881
    %2094 = vmatprep.subr.bf16.mxu0 0
    %2095 = vmatpush1.bf16.msra.mxu0 %v1882
    %2096 = vmatprep.subr.bf16.mxu0 0
    %2097 = vmatpush1.bf16.msra.mxu0 %v1883
    %2098 = vmatprep.subr.bf16.mxu0 0
    %2099 = vmatpush1.bf16.msra.mxu0 %v1884
    %2100 = vmatprep.subr.bf16.mxu0 0
    %2101 = vmatpush1.bf16.msra.mxu0 %v1885
    %2102 = vmatprep.mubr.bf16.mxu0 %v1430
    %2103 = vmatmul.mubr.bf16.gmra.mrb[0].mxu0 %v1429
    %v2104 = vpop.f32.mrb[0].mxu0
    %v2105 = vadd.f32 %v2065, %v2104
    %v2106 = vpop.f32.mrb[0].mxu0
    %v2107 = vpop.f32.mrb[0].mxu0
    %v2108 = vpop.f32.mrb[0].mxu0
    %2109 = vdwg.mxu0
    %v2110 = vmul.f32 %v2105, 0.01
    %v2111 = vmax.f32 %v2105, %v2110
    %v2112 = vpack.c.bf16 %v2111, %v2111
    %v2113 = vld [vmem:[#allocation14] sm:$0xf]
    %v2114 = vld [vmem:[#allocation14 + $0x4] sm:$0xf]
    %v2115 = vld [vmem:[#allocation14 + $0x8] sm:$0xf]
    %v2116 = vld [vmem:[#allocation14 + $0xc] sm:$0xf]
    %v2117 = vld [vmem:[#allocation14 + $0x10] sm:$0xf]
    %v2118 = vld [vmem:[#allocation14 + $0x14] sm:$0xf]
    %v2119 = vld [vmem:[#allocation14 + $0x18] sm:$0xf]
    %v2120 = vld [vmem:[#allocation14 + $0x1c] sm:$0xf]
    %v2121 = vld [vmem:[#allocation14 + $0x20] sm:$0xf]
    %v2122 = vld [vmem:[#allocation14 + $0x24] sm:$0xf]
    %v2123 = vld [vmem:[#allocation14 + $0x28] sm:$0xf]
    %v2124 = vld [vmem:[#allocation14 + $0x2c] sm:$0xf]
    %v2125 = vld [vmem:[#allocation14 + $0x30] sm:$0xf]
    %v2126 = vld [vmem:[#allocation14 + $0x34] sm:$0xf]
    %v2127 = vld [vmem:[#allocation14 + $0x38] sm:$0xf]
    %v2128 = vld [vmem:[#allocation14 + $0x3c] sm:$0xf]
    %v2129 = vld [vmem:[%s12] sm:$0x1]
    %v2131 = vlaneseq
    %v2132 = vshrl.u32 %v2131, 7
    %v2133 = vsub.s32 0, %v2132
    %v2134 = vrot.slane %v2129, %v2133
    %v2152 = vunpack.c.l.b16 %v2113
    %v2153 = vunpack.c.l.b16 %v2114
    %v2154 = vunpack.c.l.b16 %v2115
    %v2155 = vunpack.c.l.b16 %v2116
    %v2156 = vunpack.c.l.b16 %v2117
    %v2157 = vunpack.c.l.b16 %v2118
    %v2158 = vunpack.c.l.b16 %v2119
    %v2159 = vunpack.c.l.b16 %v2120
    %v2160 = vunpack.c.l.b16 %v2121
    %v2161 = vunpack.c.l.b16 %v2122
    %v2162 = vunpack.c.l.b16 %v2123
    %v2163 = vunpack.c.l.b16 %v2124
    %v2164 = vunpack.c.l.b16 %v2125
    %v2165 = vunpack.c.l.b16 %v2126
    %v2166 = vunpack.c.l.b16 %v2127
    %v2167 = vunpack.c.l.b16 %v2128
    %v2168 = vpack.c.b16 %v2153, %v2152
    %v2169 = vpack.c.b16 %v2155, %v2154
    %v2170 = vpack.c.b16 %v2157, %v2156
    %v2171 = vpack.c.b16 %v2159, %v2158
    %v2172 = vpack.c.b16 %v2161, %v2160
    %v2173 = vpack.c.b16 %v2163, %v2162
    %v2174 = vpack.c.b16 %v2165, %v2164
    %v2175 = vpack.c.b16 %v2167, %v2166
    %2184 = vmatprep.subr.bf16.mxu0 0
    %2185 = vmatpush1.bf16.msra.mxu0 %v2168
    %2186 = vmatprep.subr.bf16.mxu0 0
    %2187 = vmatpush1.bf16.msra.mxu0 %v2169
    %2188 = vmatprep.subr.bf16.mxu0 0
    %2189 = vmatpush1.bf16.msra.mxu0 %v2170
    %2190 = vmatprep.subr.bf16.mxu0 0
    %2191 = vmatpush1.bf16.msra.mxu0 %v2171
    %2192 = vmatprep.subr.bf16.mxu0 0
    %2193 = vmatpush1.bf16.msra.mxu0 %v2172
    %2194 = vmatprep.subr.bf16.mxu0 0
    %2195 = vmatpush1.bf16.msra.mxu0 %v2173
    %2196 = vmatprep.subr.bf16.mxu0 0
    %2197 = vmatpush1.bf16.msra.mxu0 %v2174
    %2198 = vmatprep.subr.bf16.mxu0 0
    %2199 = vmatpush1.bf16.msra.mxu0 %v2175
    %2200 = vmatprep.subr.bf16.mxu0 0
    %2201 = vmatpush1.bf16.msra.mxu0 0
    %2202 = vmatprep.subr.bf16.mxu0 0
    %2203 = vmatpush1.bf16.msra.mxu0 0
    %2204 = vmatprep.subr.bf16.mxu0 0
    %2205 = vmatpush1.bf16.msra.mxu0 0
    %2206 = vmatprep.subr.bf16.mxu0 0
    %2207 = vmatpush1.bf16.msra.mxu0 0
    %2208 = vmatprep.subr.bf16.mxu0 0
    %2209 = vmatpush1.bf16.msra.mxu0 0
    %2210 = vmatprep.subr.bf16.mxu0 0
    %2211 = vmatpush1.bf16.msra.mxu0 0
    %2212 = vmatprep.subr.bf16.mxu0 0
    %2213 = vmatpush1.bf16.msra.mxu0 0
    %2214 = vmatprep.subr.bf16.mxu0 0
    %2215 = vmatpush1.bf16.msra.mxu0 0
    %2216 = vmatprep.mubr.bf16.mxu0 0
    %2217 = vmatmul.mubr.bf16.gmra.mrb[0].mxu0 %v2112
    %v2218 = vpop.f32.mrb[0].mxu0
    %v2219 = vadd.f32 %v2134, %v2218
    %v2220 = vpop.f32.mrb[0].mxu0
    %v2221 = vpop.f32.mrb[0].mxu0
    %v2222 = vpop.f32.mrb[0].mxu0
    %2223 = vdwg.mxu0
    %v2224 = vpack.c.bf16 %v2219, %v2219
    %2225 = vst [vmem:[#allocation16] sm:$0xf] %v2224
    // Predicated region
    $region86: #{tpu_custom_call.1} parent=1 // pred_check
      _
    $region87: #{tpu_custom_call.1} parent=1 // pred_check_branch
      %2227 = sbr.rel (0) target = $region89
    $region88: #{tpu_custom_call.1} parent=1 // pred_region
      %s2229 = ssub.s32 64, 64
      %2230 = vsyncadd [#allocation4], %s2229
      %s2232 = sshll.u32 [#allocation16], 4
      %s2233 = int_to_ptr.vmem [resolvable:$true] %s2232
      %2235 = dma.vmem_to_hbm [thread:$0]  %s2233, 64, %s13, [#allocation4]
    $region89: #{tpu_custom_call.1} parent=1 // pred_fallthru
      _
    // Predicated region
    $region90: #{tpu_custom_call.1} parent=1 // pred_check
      _
    $region91: #{tpu_custom_call.1} parent=1 // pred_check_branch
      %2237 = sbr.rel (0) target = $region93
    $region92: #{tpu_custom_call.1} parent=1 // pred_region
      %2238 = dma.done [#allocation4], 64
    $region93: #{tpu_custom_call.1} parent=1 // pred_fallthru
      _
    %2239 = vsyncpa [#allocation3], 1
    %2240 = vsyncpa [#allocation6], 1
    %2241 = vsyncpa [#allocation9], 1
    %2242 = vsyncpa [#allocation12], 1
    %2243 = vsyncpa [#allocation15], 1
    %2244 = vsyncpa [#allocation4], 1

</llo_original>
